<compile_context>
chip_gen: v5e
topology: v5e:2x2
jax: 0.10.0
libtpu: 0.0.40
codegen_flags: <defaults>
</compile_context>

<pallas_src>
import jax
import jax.numpy as jnp
from jax.experimental import pallas as pl
from jax.experimental.pallas import tpu as pltpu

_LANES = 128


def _make_kernel(TB, S, G_seq):
    def kernel(ids_ref, ew_hbm, out_ref, gbuf, sem):
        # ids_ref : SMEM (B_pad, S) int32  scalar-prefetched (masked) token ids
        # ew_hbm  : HBM  (V+1, Hp) f32     fused table emb @ W + b, row V == 0
        # out_ref : VMEM (TB, Hp) f32
        # gbuf    : VMEM (2, TB, S, Hp) f32  double-buffered gather scratch
        # sem     : DMA semaphores (2,)
        p = pl.program_id(0)
        q = pl.program_id(1)
        nq = pl.num_programs(1)
        blk = p * G_seq + q

        def issue(block_idx, slot):
            row0 = block_idx * TB
            for t in range(TB):                      # static unroll, TB*S small
                for s in range(S):
                    rid = ids_ref[row0 + t, s]
                    pltpu.make_async_copy(
                        ew_hbm.at[pl.ds(rid, 1)],          # (1, Hp) row in HBM
                        gbuf.at[slot, t, pl.ds(s, 1)],     # (1, Hp) slot in VMEM
                        sem.at[slot],
                    ).start()

        # Prime the pipeline at the start of each core's sequential range.
        @pl.when(q == 0)
        def _():
            issue(blk, 0)

        # Prefetch the next block's rows before waiting on the current block,
        # so consecutive blocks' gather latencies overlap.
        @pl.when(q + 1 < nq)
        def _():
            issue(blk + 1, (q + 1) % 2)

        slot = q % 2
        # Wait for the current block's gathers (same-shape descriptors on the
        # same semaphore slot -- standard Pallas DMA-wait pattern).
        for t in range(TB):
            for s in range(S):
                pltpu.make_async_copy(
                    ew_hbm.at[pl.ds(0, 1)],
                    gbuf.at[slot, t, pl.ds(s, 1)],
                    sem.at[slot],
                ).wait()

        rows = gbuf[slot]                            # (TB, S, Hp) f32
        # Masked positions gathered the all-zero row, so a plain max over the
        # sequence axis reproduces (outs * mask).max(dim=1) exactly.
        out_ref[...] = jnp.max(rows, axis=1)         # (TB, Hp) lane-dense

    return kernel


def w2v_rdm_vec(ids, attn_masks, emb_table, weight, bias, *, sent_tile=8):
    """Pallas implementation of W2VRDMVec.forward starting from token ids.

    ids        : (B, S) int32 token ids (as produced by Pad_Sequence)
    attn_masks : (B, S) {0, 1}
    emb_table  : (V, E) f32 embedding table
    weight     : (E, H) f32 (== nn.Linear.weight.T)
    bias       : (H,)  f32
    returns    : (B, H) f32 sentence vectors
    """
    B, S = ids.shape
    V, E = emb_table.shape
    H = weight.shape[1]
    Hp = ((H + _LANES - 1) // _LANES) * _LANES

    # Fused (V+1, Hp) table: (emb @ W + b), lane-padded, plus one all-zero row
    # at index V that masked positions gather from.
    ew = jnp.dot(emb_table.astype(jnp.float32), weight.astype(jnp.float32),
                 precision=jax.lax.Precision.HIGHEST)
    ew = ew + bias.astype(jnp.float32)[None, :]
    ew = jnp.pad(ew, ((0, 1), (0, Hp - H)))

    # Fold the attention mask into the gather indices.
    ids_eff = jnp.where(attn_masks > 0, ids.astype(jnp.int32), jnp.int32(V))

    # Batch TB sentences per grid step; outer "parallel" axis for multi-core
    # parts, inner "arbitrary" axis carries the double-buffered prefetch.
    TB = min(sent_tile, B)
    nblocks = -(-B // TB)
    G_par = 2 if nblocks >= 2 else 1
    G_seq = -(-nblocks // G_par)
    B_pad = G_par * G_seq * TB
    if B_pad != B:
        ids_eff = jnp.pad(ids_eff, ((0, B_pad - B), (0, 0)), constant_values=V)

    out = pl.pallas_call(
        _make_kernel(TB, S, G_seq),
        out_shape=jax.ShapeDtypeStruct((B_pad, Hp), jnp.float32),
        grid_spec=pltpu.PrefetchScalarGridSpec(
            num_scalar_prefetch=1,                   # ids -> SMEM
            grid=(G_par, G_seq),
            in_specs=[
                pl.BlockSpec(memory_space=pl.ANY),   # fused table stays in HBM
            ],
            out_specs=pl.BlockSpec((TB, Hp),
                                   lambda p, q, ids: (p * G_seq + q, 0)),
            scratch_shapes=[
                pltpu.VMEM((2, TB, S, Hp), jnp.float32),   # gather double-buffer
                pltpu.SemaphoreType.DMA((2,)),
            ],
        ),
        compiler_params=pltpu.CompilerParams(
            dimension_semantics=("parallel", "arbitrary"),
        ),
    )(ids_eff, ew)

    return out[:B, :H]


if __name__ == "__main__":
    # Small shapes consistent with the module:
    #   embedding_size = 300 (hardcoded in W2VBasedModel),
    #   sent_hidden_size = 32 (must be even), small vocab / batch / seq.
    B, S, V, E, H = 2, 8, 64, 300, 32

    key = jax.random.PRNGKey(0)
    k_emb, k_w, k_b, k_ids = jax.random.split(key, 4)

    emb_table = jax.random.normal(k_emb, (V, E), dtype=jnp.float32) * 0.1
    weight = jax.random.normal(k_w, (E, H), dtype=jnp.float32) * 0.05
    bias = jax.random.normal(k_b, (H,), dtype=jnp.float32) * 0.01

    # Token ids padded the way Pad_Sequence does (pad value = 1, mask = 0 there).
    lengths = jnp.array([S, 5], dtype=jnp.int32)
    raw_ids = jax.random.randint(k_ids, (B, S), 0, V, dtype=jnp.int32)
    pos = jnp.arange(S, dtype=jnp.int32)[None, :]
    valid = pos < lengths[:, None]                     # (B, S) bool
    ids = jnp.where(valid, raw_ids, jnp.ones_like(raw_ids))
    attn_masks = valid.astype(jnp.int32)

    out = w2v_rdm_vec(ids, attn_masks, emb_table, weight, bias)
    out = jax.block_until_ready(out)

    # Pure-JAX reference matching the PyTorch forward semantics.
    emb = emb_table[ids]                                           # (B, S, E)
    outs = jnp.einsum("bse,eh->bsh", emb, weight,
                      precision=jax.lax.Precision.HIGHEST) + bias  # (B, S, H)
    masked = outs * attn_masks[..., None].astype(jnp.float32)      # (B, S, H)
    ref = masked.max(axis=1)                                       # (B, H)

    assert out.shape == (B, H)
    assert jnp.allclose(out, ref, atol=1e-4, rtol=1e-4), "mismatch vs reference"
    print("KERNEL_OK")
</pallas_src>

<mosaic_0001>
module attributes {stable_mosaic.version = 11 : i64} {
  func.func @kernel(%arg0: i32, %arg1: i32, %arg2: memref<2x8xi32, #tpu.memory_space<smem>>, %arg3: memref<65x128xf32, #tpu.memory_space<any>>, %arg4: memref<2x128xf32, #tpu.memory_space<vmem>>, %arg5: memref<2x2x8x128xf32, #tpu.memory_space<vmem>>, %arg6: memref<2x!tpu.dma_semaphore, #tpu.memory_space<semaphore_mem>>) attributes {dimension_semantics = [#tpu.dimension_semantics<parallel>, #tpu.dimension_semantics<arbitrary>], iteration_bounds = array<i64: 1, 1>, scalar_prefetch = 1 : i64, scratch_operands = 2 : i64, tpu.core_type = #tpu.core_type<tc>, window_params = [{}, {transform_indices = @transform_1, window_bounds = array<i64: 2, 128>}]} {
    %c1_i32 = arith.constant 1 : i32
    %0 = arith.muli %arg0, %c1_i32 : i32
    %1 = arith.addi %0, %arg1 : i32
    %c0_i32 = arith.constant 0 : i32
    %2 = arith.cmpi eq, %arg1, %c0_i32 : i32
    %3 = arith.extui %2 : i1 to i32
    %c0_i32_0 = arith.constant 0 : i32
    %4 = arith.cmpi ne, %3, %c0_i32_0 : i32
    scf.if %4 {
      %c2_i32_88 = arith.constant 2 : i32
      %104 = arith.muli %1, %c2_i32_88 : i32
      %c0_i32_89 = arith.constant 0 : i32
      %105 = arith.addi %104, %c0_i32_89 : i32
      %106 = arith.index_cast %105 : i32 to index
      %c0_90 = arith.constant 0 : index
      %107 = memref.load %arg2[%106, %c0_90] : memref<2x8xi32, #tpu.memory_space<smem>>
      %c0_i32_91 = arith.constant 0 : i32
      %c0_i32_92 = arith.constant 0 : i32
      %c0_i32_93 = arith.constant 0 : i32
      %c0_i32_94 = arith.constant 0 : i32
      %108 = tpu.memref_slice %arg3[%107, %c0_i32_94] : memref<65x128xf32, #tpu.memory_space<any>> -> memref<1x128xf32, #tpu.memory_space<any>>
      %c0_i32_95 = arith.constant 0 : i32
      %c0_i32_96 = arith.constant 0 : i32
      %109 = tpu.memref_slice %arg5[%c0_i32_91, %c0_i32_92, %c0_i32_95, %c0_i32_96] : memref<2x2x8x128xf32, #tpu.memory_space<vmem>> -> memref<1x1x1x128xf32, #tpu.memory_space<vmem>>
      %110 = tpu.memref_squeeze %109 : memref<1x1x1x128xf32, #tpu.memory_space<vmem>> -> memref<1x128xf32, #tpu.memory_space<vmem>>
      %111 = tpu.memref_slice %arg6[%c0_i32_93] : memref<2x!tpu.dma_semaphore, #tpu.memory_space<semaphore_mem>> -> memref<1x!tpu.dma_semaphore, #tpu.memory_space<semaphore_mem>>
      %112 = tpu.memref_squeeze %111 : memref<1x!tpu.dma_semaphore, #tpu.memory_space<semaphore_mem>> -> memref<!tpu.dma_semaphore, #tpu.memory_space<semaphore_mem>>
      tpu.enqueue_dma source(%108 : memref<1x128xf32, #tpu.memory_space<any>>) target(%110 : memref<1x128xf32, #tpu.memory_space<vmem>>) target_semaphore(%112 : memref<!tpu.dma_semaphore, #tpu.memory_space<semaphore_mem>>)
      %c0_i32_97 = arith.constant 0 : i32
      %113 = arith.addi %104, %c0_i32_97 : i32
      %114 = arith.index_cast %113 : i32 to index
      %c1 = arith.constant 1 : index
      %115 = memref.load %arg2[%114, %c1] : memref<2x8xi32, #tpu.memory_space<smem>>
      %c0_i32_98 = arith.constant 0 : i32
      %c0_i32_99 = arith.constant 0 : i32
      %c0_i32_100 = arith.constant 0 : i32
      %c0_i32_101 = arith.constant 0 : i32
      %116 = tpu.memref_slice %arg3[%115, %c0_i32_101] : memref<65x128xf32, #tpu.memory_space<any>> -> memref<1x128xf32, #tpu.memory_space<any>>
      %c1_i32_102 = arith.constant 1 : i32
      %c0_i32_103 = arith.constant 0 : i32
      %117 = tpu.memref_slice %arg5[%c0_i32_98, %c0_i32_99, %c1_i32_102, %c0_i32_103] : memref<2x2x8x128xf32, #tpu.memory_space<vmem>> -> memref<1x1x1x128xf32, #tpu.memory_space<vmem>>
      %118 = tpu.memref_squeeze %117 : memref<1x1x1x128xf32, #tpu.memory_space<vmem>> -> memref<1x128xf32, #tpu.memory_space<vmem>>
      %119 = tpu.memref_slice %arg6[%c0_i32_100] : memref<2x!tpu.dma_semaphore, #tpu.memory_space<semaphore_mem>> -> memref<1x!tpu.dma_semaphore, #tpu.memory_space<semaphore_mem>>
      %120 = tpu.memref_squeeze %119 : memref<1x!tpu.dma_semaphore, #tpu.memory_space<semaphore_mem>> -> memref<!tpu.dma_semaphore, #tpu.memory_space<semaphore_mem>>
      tpu.enqueue_dma source(%116 : memref<1x128xf32, #tpu.memory_space<any>>) target(%118 : memref<1x128xf32, #tpu.memory_space<vmem>>) target_semaphore(%120 : memref<!tpu.dma_semaphore, #tpu.memory_space<semaphore_mem>>)
      %c0_i32_104 = arith.constant 0 : i32
      %121 = arith.addi %104, %c0_i32_104 : i32
      %122 = arith.index_cast %121 : i32 to index
      %c2 = arith.constant 2 : index
      %123 = memref.load %arg2[%122, %c2] : memref<2x8xi32, #tpu.memory_space<smem>>
      %c0_i32_105 = arith.constant 0 : i32
      %c0_i32_106 = arith.constant 0 : i32
      %c0_i32_107 = arith.constant 0 : i32
      %c0_i32_108 = arith.constant 0 : i32
      %124 = tpu.memref_slice %arg3[%123, %c0_i32_108] : memref<65x128xf32, #tpu.memory_space<any>> -> memref<1x128xf32, #tpu.memory_space<any>>
      %c2_i32_109 = arith.constant 2 : i32
      %c0_i32_110 = arith.constant 0 : i32
      %125 = tpu.memref_slice %arg5[%c0_i32_105, %c0_i32_106, %c2_i32_109, %c0_i32_110] : memref<2x2x8x128xf32, #tpu.memory_space<vmem>> -> memref<1x1x1x128xf32, #tpu.memory_space<vmem>>
      %126 = tpu.memref_squeeze %125 : memref<1x1x1x128xf32, #tpu.memory_space<vmem>> -> memref<1x128xf32, #tpu.memory_space<vmem>>
      %127 = tpu.memref_slice %arg6[%c0_i32_107] : memref<2x!tpu.dma_semaphore, #tpu.memory_space<semaphore_mem>> -> memref<1x!tpu.dma_semaphore, #tpu.memory_space<semaphore_mem>>
      %128 = tpu.memref_squeeze %127 : memref<1x!tpu.dma_semaphore, #tpu.memory_space<semaphore_mem>> -> memref<!tpu.dma_semaphore, #tpu.memory_space<semaphore_mem>>
      tpu.enqueue_dma source(%124 : memref<1x128xf32, #tpu.memory_space<any>>) target(%126 : memref<1x128xf32, #tpu.memory_space<vmem>>) target_semaphore(%128 : memref<!tpu.dma_semaphore, #tpu.memory_space<semaphore_mem>>)
      %c0_i32_111 = arith.constant 0 : i32
      %129 = arith.addi %104, %c0_i32_111 : i32
      %130 = arith.index_cast %129 : i32 to index
      %c3 = arith.constant 3 : index
      %131 = memref.load %arg2[%130, %c3] : memref<2x8xi32, #tpu.memory_space<smem>>
      %c0_i32_112 = arith.constant 0 : i32
      %c0_i32_113 = arith.constant 0 : i32
      %c0_i32_114 = arith.constant 0 : i32
      %c0_i32_115 = arith.constant 0 : i32
      %132 = tpu.memref_slice %arg3[%131, %c0_i32_115] : memref<65x128xf32, #tpu.memory_space<any>> -> memref<1x128xf32, #tpu.memory_space<any>>
      %c3_i32_116 = arith.constant 3 : i32
      %c0_i32_117 = arith.constant 0 : i32
      %133 = tpu.memref_slice %arg5[%c0_i32_112, %c0_i32_113, %c3_i32_116, %c0_i32_117] : memref<2x2x8x128xf32, #tpu.memory_space<vmem>> -> memref<1x1x1x128xf32, #tpu.memory_space<vmem>>
      %134 = tpu.memref_squeeze %133 : memref<1x1x1x128xf32, #tpu.memory_space<vmem>> -> memref<1x128xf32, #tpu.memory_space<vmem>>
      %135 = tpu.memref_slice %arg6[%c0_i32_114] : memref<2x!tpu.dma_semaphore, #tpu.memory_space<semaphore_mem>> -> memref<1x!tpu.dma_semaphore, #tpu.memory_space<semaphore_mem>>
      %136 = tpu.memref_squeeze %135 : memref<1x!tpu.dma_semaphore, #tpu.memory_space<semaphore_mem>> -> memref<!tpu.dma_semaphore, #tpu.memory_space<semaphore_mem>>
      tpu.enqueue_dma source(%132 : memref<1x128xf32, #tpu.memory_space<any>>) target(%134 : memref<1x128xf32, #tpu.memory_space<vmem>>) target_semaphore(%136 : memref<!tpu.dma_semaphore, #tpu.memory_space<semaphore_mem>>)
      %c0_i32_118 = arith.constant 0 : i32
      %137 = arith.addi %104, %c0_i32_118 : i32
      %138 = arith.index_cast %137 : i32 to index
      %c4 = arith.constant 4 : index
      %139 = memref.load %arg2[%138, %c4] : memref<2x8xi32, #tpu.memory_space<smem>>
      %c0_i32_119 = arith.constant 0 : i32
      %c0_i32_120 = arith.constant 0 : i32
      %c0_i32_121 = arith.constant 0 : i32
      %c0_i32_122 = arith.constant 0 : i32
      %140 = tpu.memref_slice %arg3[%139, %c0_i32_122] : memref<65x128xf32, #tpu.memory_space<any>> -> memref<1x128xf32, #tpu.memory_space<any>>
      %c4_i32_123 = arith.constant 4 : i32
      %c0_i32_124 = arith.constant 0 : i32
      %141 = tpu.memref_slice %arg5[%c0_i32_119, %c0_i32_120, %c4_i32_123, %c0_i32_124] : memref<2x2x8x128xf32, #tpu.memory_space<vmem>> -> memref<1x1x1x128xf32, #tpu.memory_space<vmem>>
      %142 = tpu.memref_squeeze %141 : memref<1x1x1x128xf32, #tpu.memory_space<vmem>> -> memref<1x128xf32, #tpu.memory_space<vmem>>
      %143 = tpu.memref_slice %arg6[%c0_i32_121] : memref<2x!tpu.dma_semaphore, #tpu.memory_space<semaphore_mem>> -> memref<1x!tpu.dma_semaphore, #tpu.memory_space<semaphore_mem>>
      %144 = tpu.memref_squeeze %143 : memref<1x!tpu.dma_semaphore, #tpu.memory_space<semaphore_mem>> -> memref<!tpu.dma_semaphore, #tpu.memory_space<semaphore_mem>>
      tpu.enqueue_dma source(%140 : memref<1x128xf32, #tpu.memory_space<any>>) target(%142 : memref<1x128xf32, #tpu.memory_space<vmem>>) target_semaphore(%144 : memref<!tpu.dma_semaphore, #tpu.memory_space<semaphore_mem>>)
      %c0_i32_125 = arith.constant 0 : i32
      %145 = arith.addi %104, %c0_i32_125 : i32
      %146 = arith.index_cast %145 : i32 to index
      %c5 = arith.constant 5 : index
      %147 = memref.load %arg2[%146, %c5] : memref<2x8xi32, #tpu.memory_space<smem>>
      %c0_i32_126 = arith.constant 0 : i32
      %c0_i32_127 = arith.constant 0 : i32
      %c0_i32_128 = arith.constant 0 : i32
      %c0_i32_129 = arith.constant 0 : i32
      %148 = tpu.memref_slice %arg3[%147, %c0_i32_129] : memref<65x128xf32, #tpu.memory_space<any>> -> memref<1x128xf32, #tpu.memory_space<any>>
      %c5_i32_130 = arith.constant 5 : i32
      %c0_i32_131 = arith.constant 0 : i32
      %149 = tpu.memref_slice %arg5[%c0_i32_126, %c0_i32_127, %c5_i32_130, %c0_i32_131] : memref<2x2x8x128xf32, #tpu.memory_space<vmem>> -> memref<1x1x1x128xf32, #tpu.memory_space<vmem>>
      %150 = tpu.memref_squeeze %149 : memref<1x1x1x128xf32, #tpu.memory_space<vmem>> -> memref<1x128xf32, #tpu.memory_space<vmem>>
      %151 = tpu.memref_slice %arg6[%c0_i32_128] : memref<2x!tpu.dma_semaphore, #tpu.memory_space<semaphore_mem>> -> memref<1x!tpu.dma_semaphore, #tpu.memory_space<semaphore_mem>>
      %152 = tpu.memref_squeeze %151 : memref<1x!tpu.dma_semaphore, #tpu.memory_space<semaphore_mem>> -> memref<!tpu.dma_semaphore, #tpu.memory_space<semaphore_mem>>
      tpu.enqueue_dma source(%148 : memref<1x128xf32, #tpu.memory_space<any>>) target(%150 : memref<1x128xf32, #tpu.memory_space<vmem>>) target_semaphore(%152 : memref<!tpu.dma_semaphore, #tpu.memory_space<semaphore_mem>>)
      %c0_i32_132 = arith.constant 0 : i32
      %153 = arith.addi %104, %c0_i32_132 : i32
      %154 = arith.index_cast %153 : i32 to index
      %c6 = arith.constant 6 : index
      %155 = memref.load %arg2[%154, %c6] : memref<2x8xi32, #tpu.memory_space<smem>>
      %c0_i32_133 = arith.constant 0 : i32
      %c0_i32_134 = arith.constant 0 : i32
      %c0_i32_135 = arith.constant 0 : i32
      %c0_i32_136 = arith.constant 0 : i32
      %156 = tpu.memref_slice %arg3[%155, %c0_i32_136] : memref<65x128xf32, #tpu.memory_space<any>> -> memref<1x128xf32, #tpu.memory_space<any>>
      %c6_i32_137 = arith.constant 6 : i32
      %c0_i32_138 = arith.constant 0 : i32
      %157 = tpu.memref_slice %arg5[%c0_i32_133, %c0_i32_134, %c6_i32_137, %c0_i32_138] : memref<2x2x8x128xf32, #tpu.memory_space<vmem>> -> memref<1x1x1x128xf32, #tpu.memory_space<vmem>>
      %158 = tpu.memref_squeeze %157 : memref<1x1x1x128xf32, #tpu.memory_space<vmem>> -> memref<1x128xf32, #tpu.memory_space<vmem>>
      %159 = tpu.memref_slice %arg6[%c0_i32_135] : memref<2x!tpu.dma_semaphore, #tpu.memory_space<semaphore_mem>> -> memref<1x!tpu.dma_semaphore, #tpu.memory_space<semaphore_mem>>
      %160 = tpu.memref_squeeze %159 : memref<1x!tpu.dma_semaphore, #tpu.memory_space<semaphore_mem>> -> memref<!tpu.dma_semaphore, #tpu.memory_space<semaphore_mem>>
      tpu.enqueue_dma source(%156 : memref<1x128xf32, #tpu.memory_space<any>>) target(%158 : memref<1x128xf32, #tpu.memory_space<vmem>>) target_semaphore(%160 : memref<!tpu.dma_semaphore, #tpu.memory_space<semaphore_mem>>)
      %c0_i32_139 = arith.constant 0 : i32
      %161 = arith.addi %104, %c0_i32_139 : i32
      %162 = arith.index_cast %161 : i32 to index
      %c7 = arith.constant 7 : index
      %163 = memref.load %arg2[%162, %c7] : memref<2x8xi32, #tpu.memory_space<smem>>
      %c0_i32_140 = arith.constant 0 : i32
      %c0_i32_141 = arith.constant 0 : i32
      %c0_i32_142 = arith.constant 0 : i32
      %c0_i32_143 = arith.constant 0 : i32
      %164 = tpu.memref_slice %arg3[%163, %c0_i32_143] : memref<65x128xf32, #tpu.memory_space<any>> -> memref<1x128xf32, #tpu.memory_space<any>>
      %c7_i32_144 = arith.constant 7 : i32
      %c0_i32_145 = arith.constant 0 : i32
      %165 = tpu.memref_slice %arg5[%c0_i32_140, %c0_i32_141, %c7_i32_144, %c0_i32_145] : memref<2x2x8x128xf32, #tpu.memory_space<vmem>> -> memref<1x1x1x128xf32, #tpu.memory_space<vmem>>
      %166 = tpu.memref_squeeze %165 : memref<1x1x1x128xf32, #tpu.memory_space<vmem>> -> memref<1x128xf32, #tpu.memory_space<vmem>>
      %167 = tpu.memref_slice %arg6[%c0_i32_142] : memref<2x!tpu.dma_semaphore, #tpu.memory_space<semaphore_mem>> -> memref<1x!tpu.dma_semaphore, #tpu.memory_space<semaphore_mem>>
      %168 = tpu.memref_squeeze %167 : memref<1x!tpu.dma_semaphore, #tpu.memory_space<semaphore_mem>> -> memref<!tpu.dma_semaphore, #tpu.memory_space<semaphore_mem>>
      tpu.enqueue_dma source(%164 : memref<1x128xf32, #tpu.memory_space<any>>) target(%166 : memref<1x128xf32, #tpu.memory_space<vmem>>) target_semaphore(%168 : memref<!tpu.dma_semaphore, #tpu.memory_space<semaphore_mem>>)
      %c1_i32_146 = arith.constant 1 : i32
      %169 = arith.addi %104, %c1_i32_146 : i32
      %170 = arith.index_cast %169 : i32 to index
      %c0_147 = arith.constant 0 : index
      %171 = memref.load %arg2[%170, %c0_147] : memref<2x8xi32, #tpu.memory_space<smem>>
      %c0_i32_148 = arith.constant 0 : i32
      %c1_i32_149 = arith.constant 1 : i32
      %c0_i32_150 = arith.constant 0 : i32
      %c0_i32_151 = arith.constant 0 : i32
      %172 = tpu.memref_slice %arg3[%171, %c0_i32_151] : memref<65x128xf32, #tpu.memory_space<any>> -> memref<1x128xf32, #tpu.memory_space<any>>
      %c0_i32_152 = arith.constant 0 : i32
      %c0_i32_153 = arith.constant 0 : i32
      %173 = tpu.memref_slice %arg5[%c0_i32_148, %c1_i32_149, %c0_i32_152, %c0_i32_153] : memref<2x2x8x128xf32, #tpu.memory_space<vmem>> -> memref<1x1x1x128xf32, #tpu.memory_space<vmem>>
      %174 = tpu.memref_squeeze %173 : memref<1x1x1x128xf32, #tpu.memory_space<vmem>> -> memref<1x128xf32, #tpu.memory_space<vmem>>
      %175 = tpu.memref_slice %arg6[%c0_i32_150] : memref<2x!tpu.dma_semaphore, #tpu.memory_space<semaphore_mem>> -> memref<1x!tpu.dma_semaphore, #tpu.memory_space<semaphore_mem>>
      %176 = tpu.memref_squeeze %175 : memref<1x!tpu.dma_semaphore, #tpu.memory_space<semaphore_mem>> -> memref<!tpu.dma_semaphore, #tpu.memory_space<semaphore_mem>>
      tpu.enqueue_dma source(%172 : memref<1x128xf32, #tpu.memory_space<any>>) target(%174 : memref<1x128xf32, #tpu.memory_space<vmem>>) target_semaphore(%176 : memref<!tpu.dma_semaphore, #tpu.memory_space<semaphore_mem>>)
      %c1_i32_154 = arith.constant 1 : i32
      %177 = arith.addi %104, %c1_i32_154 : i32
      %178 = arith.index_cast %177 : i32 to index
      %c1_155 = arith.constant 1 : index
      %179 = memref.load %arg2[%178, %c1_155] : memref<2x8xi32, #tpu.memory_space<smem>>
      %c0_i32_156 = arith.constant 0 : i32
      %c1_i32_157 = arith.constant 1 : i32
      %c0_i32_158 = arith.constant 0 : i32
      %c0_i32_159 = arith.constant 0 : i32
      %180 = tpu.memref_slice %arg3[%179, %c0_i32_159] : memref<65x128xf32, #tpu.memory_space<any>> -> memref<1x128xf32, #tpu.memory_space<any>>
      %c1_i32_160 = arith.constant 1 : i32
      %c0_i32_161 = arith.constant 0 : i32
      %181 = tpu.memref_slice %arg5[%c0_i32_156, %c1_i32_157, %c1_i32_160, %c0_i32_161] : memref<2x2x8x128xf32, #tpu.memory_space<vmem>> -> memref<1x1x1x128xf32, #tpu.memory_space<vmem>>
      %182 = tpu.memref_squeeze %181 : memref<1x1x1x128xf32, #tpu.memory_space<vmem>> -> memref<1x128xf32, #tpu.memory_space<vmem>>
      %183 = tpu.memref_slice %arg6[%c0_i32_158] : memref<2x!tpu.dma_semaphore, #tpu.memory_space<semaphore_mem>> -> memref<1x!tpu.dma_semaphore, #tpu.memory_space<semaphore_mem>>
      %184 = tpu.memref_squeeze %183 : memref<1x!tpu.dma_semaphore, #tpu.memory_space<semaphore_mem>> -> memref<!tpu.dma_semaphore, #tpu.memory_space<semaphore_mem>>
      tpu.enqueue_dma source(%180 : memref<1x128xf32, #tpu.memory_space<any>>) target(%182 : memref<1x128xf32, #tpu.memory_space<vmem>>) target_semaphore(%184 : memref<!tpu.dma_semaphore, #tpu.memory_space<semaphore_mem>>)
      %c1_i32_162 = arith.constant 1 : i32
      %185 = arith.addi %104, %c1_i32_162 : i32
      %186 = arith.index_cast %185 : i32 to index
      %c2_163 = arith.constant 2 : index
      %187 = memref.load %arg2[%186, %c2_163] : memref<2x8xi32, #tpu.memory_space<smem>>
      %c0_i32_164 = arith.constant 0 : i32
      %c1_i32_165 = arith.constant 1 : i32
      %c0_i32_166 = arith.constant 0 : i32
      %c0_i32_167 = arith.constant 0 : i32
      %188 = tpu.memref_slice %arg3[%187, %c0_i32_167] : memref<65x128xf32, #tpu.memory_space<any>> -> memref<1x128xf32, #tpu.memory_space<any>>
      %c2_i32_168 = arith.constant 2 : i32
      %c0_i32_169 = arith.constant 0 : i32
      %189 = tpu.memref_slice %arg5[%c0_i32_164, %c1_i32_165, %c2_i32_168, %c0_i32_169] : memref<2x2x8x128xf32, #tpu.memory_space<vmem>> -> memref<1x1x1x128xf32, #tpu.memory_space<vmem>>
      %190 = tpu.memref_squeeze %189 : memref<1x1x1x128xf32, #tpu.memory_space<vmem>> -> memref<1x128xf32, #tpu.memory_space<vmem>>
      %191 = tpu.memref_slice %arg6[%c0_i32_166] : memref<2x!tpu.dma_semaphore, #tpu.memory_space<semaphore_mem>> -> memref<1x!tpu.dma_semaphore, #tpu.memory_space<semaphore_mem>>
      %192 = tpu.memref_squeeze %191 : memref<1x!tpu.dma_semaphore, #tpu.memory_space<semaphore_mem>> -> memref<!tpu.dma_semaphore, #tpu.memory_space<semaphore_mem>>
      tpu.enqueue_dma source(%188 : memref<1x128xf32, #tpu.memory_space<any>>) target(%190 : memref<1x128xf32, #tpu.memory_space<vmem>>) target_semaphore(%192 : memref<!tpu.dma_semaphore, #tpu.memory_space<semaphore_mem>>)
      %c1_i32_170 = arith.constant 1 : i32
      %193 = arith.addi %104, %c1_i32_170 : i32
      %194 = arith.index_cast %193 : i32 to index
      %c3_171 = arith.constant 3 : index
      %195 = memref.load %arg2[%194, %c3_171] : memref<2x8xi32, #tpu.memory_space<smem>>
      %c0_i32_172 = arith.constant 0 : i32
      %c1_i32_173 = arith.constant 1 : i32
      %c0_i32_174 = arith.constant 0 : i32
      %c0_i32_175 = arith.constant 0 : i32
      %196 = tpu.memref_slice %arg3[%195, %c0_i32_175] : memref<65x128xf32, #tpu.memory_space<any>> -> memref<1x128xf32, #tpu.memory_space<any>>
      %c3_i32_176 = arith.constant 3 : i32
      %c0_i32_177 = arith.constant 0 : i32
      %197 = tpu.memref_slice %arg5[%c0_i32_172, %c1_i32_173, %c3_i32_176, %c0_i32_177] : memref<2x2x8x128xf32, #tpu.memory_space<vmem>> -> memref<1x1x1x128xf32, #tpu.memory_space<vmem>>
      %198 = tpu.memref_squeeze %197 : memref<1x1x1x128xf32, #tpu.memory_space<vmem>> -> memref<1x128xf32, #tpu.memory_space<vmem>>
      %199 = tpu.memref_slice %arg6[%c0_i32_174] : memref<2x!tpu.dma_semaphore, #tpu.memory_space<semaphore_mem>> -> memref<1x!tpu.dma_semaphore, #tpu.memory_space<semaphore_mem>>
      %200 = tpu.memref_squeeze %199 : memref<1x!tpu.dma_semaphore, #tpu.memory_space<semaphore_mem>> -> memref<!tpu.dma_semaphore, #tpu.memory_space<semaphore_mem>>
      tpu.enqueue_dma source(%196 : memref<1x128xf32, #tpu.memory_space<any>>) target(%198 : memref<1x128xf32, #tpu.memory_space<vmem>>) target_semaphore(%200 : memref<!tpu.dma_semaphore, #tpu.memory_space<semaphore_mem>>)
      %c1_i32_178 = arith.constant 1 : i32
      %201 = arith.addi %104, %c1_i32_178 : i32
      %202 = arith.index_cast %201 : i32 to index
      %c4_179 = arith.constant 4 : index
      %203 = memref.load %arg2[%202, %c4_179] : memref<2x8xi32, #tpu.memory_space<smem>>
      %c0_i32_180 = arith.constant 0 : i32
      %c1_i32_181 = arith.constant 1 : i32
      %c0_i32_182 = arith.constant 0 : i32
      %c0_i32_183 = arith.constant 0 : i32
      %204 = tpu.memref_slice %arg3[%203, %c0_i32_183] : memref<65x128xf32, #tpu.memory_space<any>> -> memref<1x128xf32, #tpu.memory_space<any>>
      %c4_i32_184 = arith.constant 4 : i32
      %c0_i32_185 = arith.constant 0 : i32
      %205 = tpu.memref_slice %arg5[%c0_i32_180, %c1_i32_181, %c4_i32_184, %c0_i32_185] : memref<2x2x8x128xf32, #tpu.memory_space<vmem>> -> memref<1x1x1x128xf32, #tpu.memory_space<vmem>>
      %206 = tpu.memref_squeeze %205 : memref<1x1x1x128xf32, #tpu.memory_space<vmem>> -> memref<1x128xf32, #tpu.memory_space<vmem>>
      %207 = tpu.memref_slice %arg6[%c0_i32_182] : memref<2x!tpu.dma_semaphore, #tpu.memory_space<semaphore_mem>> -> memref<1x!tpu.dma_semaphore, #tpu.memory_space<semaphore_mem>>
      %208 = tpu.memref_squeeze %207 : memref<1x!tpu.dma_semaphore, #tpu.memory_space<semaphore_mem>> -> memref<!tpu.dma_semaphore, #tpu.memory_space<semaphore_mem>>
      tpu.enqueue_dma source(%204 : memref<1x128xf32, #tpu.memory_space<any>>) target(%206 : memref<1x128xf32, #tpu.memory_space<vmem>>) target_semaphore(%208 : memref<!tpu.dma_semaphore, #tpu.memory_space<semaphore_mem>>)
      %c1_i32_186 = arith.constant 1 : i32
      %209 = arith.addi %104, %c1_i32_186 : i32
      %210 = arith.index_cast %209 : i32 to index
      %c5_187 = arith.constant 5 : index
      %211 = memref.load %arg2[%210, %c5_187] : memref<2x8xi32, #tpu.memory_space<smem>>
      %c0_i32_188 = arith.constant 0 : i32
      %c1_i32_189 = arith.constant 1 : i32
      %c0_i32_190 = arith.constant 0 : i32
      %c0_i32_191 = arith.constant 0 : i32
      %212 = tpu.memref_slice %arg3[%211, %c0_i32_191] : memref<65x128xf32, #tpu.memory_space<any>> -> memref<1x128xf32, #tpu.memory_space<any>>
      %c5_i32_192 = arith.constant 5 : i32
      %c0_i32_193 = arith.constant 0 : i32
      %213 = tpu.memref_slice %arg5[%c0_i32_188, %c1_i32_189, %c5_i32_192, %c0_i32_193] : memref<2x2x8x128xf32, #tpu.memory_space<vmem>> -> memref<1x1x1x128xf32, #tpu.memory_space<vmem>>
      %214 = tpu.memref_squeeze %213 : memref<1x1x1x128xf32, #tpu.memory_space<vmem>> -> memref<1x128xf32, #tpu.memory_space<vmem>>
      %215 = tpu.memref_slice %arg6[%c0_i32_190] : memref<2x!tpu.dma_semaphore, #tpu.memory_space<semaphore_mem>> -> memref<1x!tpu.dma_semaphore, #tpu.memory_space<semaphore_mem>>
      %216 = tpu.memref_squeeze %215 : memref<1x!tpu.dma_semaphore, #tpu.memory_space<semaphore_mem>> -> memref<!tpu.dma_semaphore, #tpu.memory_space<semaphore_mem>>
      tpu.enqueue_dma source(%212 : memref<1x128xf32, #tpu.memory_space<any>>) target(%214 : memref<1x128xf32, #tpu.memory_space<vmem>>) target_semaphore(%216 : memref<!tpu.dma_semaphore, #tpu.memory_space<semaphore_mem>>)
      %c1_i32_194 = arith.constant 1 : i32
      %217 = arith.addi %104, %c1_i32_194 : i32
      %218 = arith.index_cast %217 : i32 to index
      %c6_195 = arith.constant 6 : index
      %219 = memref.load %arg2[%218, %c6_195] : memref<2x8xi32, #tpu.memory_space<smem>>
      %c0_i32_196 = arith.constant 0 : i32
      %c1_i32_197 = arith.constant 1 : i32
      %c0_i32_198 = arith.constant 0 : i32
      %c0_i32_199 = arith.constant 0 : i32
      %220 = tpu.memref_slice %arg3[%219, %c0_i32_199] : memref<65x128xf32, #tpu.memory_space<any>> -> memref<1x128xf32, #tpu.memory_space<any>>
      %c6_i32_200 = arith.constant 6 : i32
      %c0_i32_201 = arith.constant 0 : i32
      %221 = tpu.memref_slice %arg5[%c0_i32_196, %c1_i32_197, %c6_i32_200, %c0_i32_201] : memref<2x2x8x128xf32, #tpu.memory_space<vmem>> -> memref<1x1x1x128xf32, #tpu.memory_space<vmem>>
      %222 = tpu.memref_squeeze %221 : memref<1x1x1x128xf32, #tpu.memory_space<vmem>> -> memref<1x128xf32, #tpu.memory_space<vmem>>
      %223 = tpu.memref_slice %arg6[%c0_i32_198] : memref<2x!tpu.dma_semaphore, #tpu.memory_space<semaphore_mem>> -> memref<1x!tpu.dma_semaphore, #tpu.memory_space<semaphore_mem>>
      %224 = tpu.memref_squeeze %223 : memref<1x!tpu.dma_semaphore, #tpu.memory_space<semaphore_mem>> -> memref<!tpu.dma_semaphore, #tpu.memory_space<semaphore_mem>>
      tpu.enqueue_dma source(%220 : memref<1x128xf32, #tpu.memory_space<any>>) target(%222 : memref<1x128xf32, #tpu.memory_space<vmem>>) target_semaphore(%224 : memref<!tpu.dma_semaphore, #tpu.memory_space<semaphore_mem>>)
      %c1_i32_202 = arith.constant 1 : i32
      %225 = arith.addi %104, %c1_i32_202 : i32
      %226 = arith.index_cast %225 : i32 to index
      %c7_203 = arith.constant 7 : index
      %227 = memref.load %arg2[%226, %c7_203] : memref<2x8xi32, #tpu.memory_space<smem>>
      %c0_i32_204 = arith.constant 0 : i32
      %c1_i32_205 = arith.constant 1 : i32
      %c0_i32_206 = arith.constant 0 : i32
      %c0_i32_207 = arith.constant 0 : i32
      %228 = tpu.memref_slice %arg3[%227, %c0_i32_207] : memref<65x128xf32, #tpu.memory_space<any>> -> memref<1x128xf32, #tpu.memory_space<any>>
      %c7_i32_208 = arith.constant 7 : i32
      %c0_i32_209 = arith.constant 0 : i32
      %229 = tpu.memref_slice %arg5[%c0_i32_204, %c1_i32_205, %c7_i32_208, %c0_i32_209] : memref<2x2x8x128xf32, #tpu.memory_space<vmem>> -> memref<1x1x1x128xf32, #tpu.memory_space<vmem>>
      %230 = tpu.memref_squeeze %229 : memref<1x1x1x128xf32, #tpu.memory_space<vmem>> -> memref<1x128xf32, #tpu.memory_space<vmem>>
      %231 = tpu.memref_slice %arg6[%c0_i32_206] : memref<2x!tpu.dma_semaphore, #tpu.memory_space<semaphore_mem>> -> memref<1x!tpu.dma_semaphore, #tpu.memory_space<semaphore_mem>>
      %232 = tpu.memref_squeeze %231 : memref<1x!tpu.dma_semaphore, #tpu.memory_space<semaphore_mem>> -> memref<!tpu.dma_semaphore, #tpu.memory_space<semaphore_mem>>
      tpu.enqueue_dma source(%228 : memref<1x128xf32, #tpu.memory_space<any>>) target(%230 : memref<1x128xf32, #tpu.memory_space<vmem>>) target_semaphore(%232 : memref<!tpu.dma_semaphore, #tpu.memory_space<semaphore_mem>>)
    } else {
    }
    %c1_i32_1 = arith.constant 1 : i32
    %5 = arith.addi %arg1, %c1_i32_1 : i32
    %c1_i32_2 = arith.constant 1 : i32
    %6 = arith.cmpi slt, %5, %c1_i32_2 : i32
    %7 = arith.extui %6 : i1 to i32
    %c0_i32_3 = arith.constant 0 : i32
    %8 = arith.cmpi ne, %7, %c0_i32_3 : i32
    scf.if %8 {
      %c1_i32_88 = arith.constant 1 : i32
      %104 = arith.addi %1, %c1_i32_88 : i32
      %c1_i32_89 = arith.constant 1 : i32
      %105 = arith.addi %arg1, %c1_i32_89 : i32
      %c2_i32_90 = arith.constant 2 : i32
      %c0_i32_91 = arith.constant 0 : i32
      %106 = arith.cmpi eq, %c2_i32_90, %c0_i32_91 : i32
      %c1_i32_92 = arith.constant 1 : i32
      %107 = arith.select %106, %c1_i32_92, %c2_i32_90 : i32
      %108 = arith.remsi %105, %107 : i32
      %c0_i32_93 = arith.constant 0 : i32
      %109 = arith.cmpi ne, %108, %c0_i32_93 : i32
      %c0_i32_94 = arith.constant 0 : i32
      %110 = arith.cmpi slt, %108, %c0_i32_94 : i32
      %c0_i32_95 = arith.constant 0 : i32
      %111 = arith.cmpi slt, %107, %c0_i32_95 : i32
      %112 = arith.xori %110, %111 : i1
      %113 = arith.andi %112, %109 : i1
      %114 = arith.addi %108, %107 : i32
      %115 = arith.select %113, %114, %108 : i32
      %c2_i32_96 = arith.constant 2 : i32
      %116 = arith.muli %104, %c2_i32_96 : i32
      %c0_i32_97 = arith.constant 0 : i32
      %117 = arith.addi %116, %c0_i32_97 : i32
      %118 = arith.index_cast %117 : i32 to index
      %c0_98 = arith.constant 0 : index
      %119 = memref.load %arg2[%118, %c0_98] : memref<2x8xi32, #tpu.memory_space<smem>>
      %c0_i32_99 = arith.constant 0 : i32
      %c0_i32_100 = arith.constant 0 : i32
      %120 = tpu.memref_slice %arg3[%119, %c0_i32_100] : memref<65x128xf32, #tpu.memory_space<any>> -> memref<1x128xf32, #tpu.memory_space<any>>
      %c0_i32_101 = arith.constant 0 : i32
      %c0_i32_102 = arith.constant 0 : i32
      %121 = tpu.memref_slice %arg5[%115, %c0_i32_99, %c0_i32_101, %c0_i32_102] : memref<2x2x8x128xf32, #tpu.memory_space<vmem>> -> memref<1x1x1x128xf32, #tpu.memory_space<vmem>>
      %122 = tpu.memref_squeeze %121 : memref<1x1x1x128xf32, #tpu.memory_space<vmem>> -> memref<1x128xf32, #tpu.memory_space<vmem>>
      %123 = tpu.memref_slice %arg6[%115] : memref<2x!tpu.dma_semaphore, #tpu.memory_space<semaphore_mem>> -> memref<1x!tpu.dma_semaphore, #tpu.memory_space<semaphore_mem>>
      %124 = tpu.memref_squeeze %123 : memref<1x!tpu.dma_semaphore, #tpu.memory_space<semaphore_mem>> -> memref<!tpu.dma_semaphore, #tpu.memory_space<semaphore_mem>>
      tpu.enqueue_dma source(%120 : memref<1x128xf32, #tpu.memory_space<any>>) target(%122 : memref<1x128xf32, #tpu.memory_space<vmem>>) target_semaphore(%124 : memref<!tpu.dma_semaphore, #tpu.memory_space<semaphore_mem>>)
      %c0_i32_103 = arith.constant 0 : i32
      %125 = arith.addi %116, %c0_i32_103 : i32
      %126 = arith.index_cast %125 : i32 to index
      %c1 = arith.constant 1 : index
      %127 = memref.load %arg2[%126, %c1] : memref<2x8xi32, #tpu.memory_space<smem>>
      %c0_i32_104 = arith.constant 0 : i32
      %c0_i32_105 = arith.constant 0 : i32
      %128 = tpu.memref_slice %arg3[%127, %c0_i32_105] : memref<65x128xf32, #tpu.memory_space<any>> -> memref<1x128xf32, #tpu.memory_space<any>>
      %c1_i32_106 = arith.constant 1 : i32
      %c0_i32_107 = arith.constant 0 : i32
      %129 = tpu.memref_slice %arg5[%115, %c0_i32_104, %c1_i32_106, %c0_i32_107] : memref<2x2x8x128xf32, #tpu.memory_space<vmem>> -> memref<1x1x1x128xf32, #tpu.memory_space<vmem>>
      %130 = tpu.memref_squeeze %129 : memref<1x1x1x128xf32, #tpu.memory_space<vmem>> -> memref<1x128xf32, #tpu.memory_space<vmem>>
      %131 = tpu.memref_slice %arg6[%115] : memref<2x!tpu.dma_semaphore, #tpu.memory_space<semaphore_mem>> -> memref<1x!tpu.dma_semaphore, #tpu.memory_space<semaphore_mem>>
      %132 = tpu.memref_squeeze %131 : memref<1x!tpu.dma_semaphore, #tpu.memory_space<semaphore_mem>> -> memref<!tpu.dma_semaphore, #tpu.memory_space<semaphore_mem>>
      tpu.enqueue_dma source(%128 : memref<1x128xf32, #tpu.memory_space<any>>) target(%130 : memref<1x128xf32, #tpu.memory_space<vmem>>) target_semaphore(%132 : memref<!tpu.dma_semaphore, #tpu.memory_space<semaphore_mem>>)
      %c0_i32_108 = arith.constant 0 : i32
      %133 = arith.addi %116, %c0_i32_108 : i32
      %134 = arith.index_cast %133 : i32 to index
      %c2 = arith.constant 2 : index
      %135 = memref.load %arg2[%134, %c2] : memref<2x8xi32, #tpu.memory_space<smem>>
      %c0_i32_109 = arith.constant 0 : i32
      %c0_i32_110 = arith.constant 0 : i32
      %136 = tpu.memref_slice %arg3[%135, %c0_i32_110] : memref<65x128xf32, #tpu.memory_space<any>> -> memref<1x128xf32, #tpu.memory_space<any>>
      %c2_i32_111 = arith.constant 2 : i32
      %c0_i32_112 = arith.constant 0 : i32
      %137 = tpu.memref_slice %arg5[%115, %c0_i32_109, %c2_i32_111, %c0_i32_112] : memref<2x2x8x128xf32, #tpu.memory_space<vmem>> -> memref<1x1x1x128xf32, #tpu.memory_space<vmem>>
      %138 = tpu.memref_squeeze %137 : memref<1x1x1x128xf32, #tpu.memory_space<vmem>> -> memref<1x128xf32, #tpu.memory_space<vmem>>
      %139 = tpu.memref_slice %arg6[%115] : memref<2x!tpu.dma_semaphore, #tpu.memory_space<semaphore_mem>> -> memref<1x!tpu.dma_semaphore, #tpu.memory_space<semaphore_mem>>
      %140 = tpu.memref_squeeze %139 : memref<1x!tpu.dma_semaphore, #tpu.memory_space<semaphore_mem>> -> memref<!tpu.dma_semaphore, #tpu.memory_space<semaphore_mem>>
      tpu.enqueue_dma source(%136 : memref<1x128xf32, #tpu.memory_space<any>>) target(%138 : memref<1x128xf32, #tpu.memory_space<vmem>>) target_semaphore(%140 : memref<!tpu.dma_semaphore, #tpu.memory_space<semaphore_mem>>)
      %c0_i32_113 = arith.constant 0 : i32
      %141 = arith.addi %116, %c0_i32_113 : i32
      %142 = arith.index_cast %141 : i32 to index
      %c3 = arith.constant 3 : index
      %143 = memref.load %arg2[%142, %c3] : memref<2x8xi32, #tpu.memory_space<smem>>
      %c0_i32_114 = arith.constant 0 : i32
      %c0_i32_115 = arith.constant 0 : i32
      %144 = tpu.memref_slice %arg3[%143, %c0_i32_115] : memref<65x128xf32, #tpu.memory_space<any>> -> memref<1x128xf32, #tpu.memory_space<any>>
      %c3_i32_116 = arith.constant 3 : i32
      %c0_i32_117 = arith.constant 0 : i32
      %145 = tpu.memref_slice %arg5[%115, %c0_i32_114, %c3_i32_116, %c0_i32_117] : memref<2x2x8x128xf32, #tpu.memory_space<vmem>> -> memref<1x1x1x128xf32, #tpu.memory_space<vmem>>
      %146 = tpu.memref_squeeze %145 : memref<1x1x1x128xf32, #tpu.memory_space<vmem>> -> memref<1x128xf32, #tpu.memory_space<vmem>>
      %147 = tpu.memref_slice %arg6[%115] : memref<2x!tpu.dma_semaphore, #tpu.memory_space<semaphore_mem>> -> memref<1x!tpu.dma_semaphore, #tpu.memory_space<semaphore_mem>>
      %148 = tpu.memref_squeeze %147 : memref<1x!tpu.dma_semaphore, #tpu.memory_space<semaphore_mem>> -> memref<!tpu.dma_semaphore, #tpu.memory_space<semaphore_mem>>
      tpu.enqueue_dma source(%144 : memref<1x128xf32, #tpu.memory_space<any>>) target(%146 : memref<1x128xf32, #tpu.memory_space<vmem>>) target_semaphore(%148 : memref<!tpu.dma_semaphore, #tpu.memory_space<semaphore_mem>>)
      %c0_i32_118 = arith.constant 0 : i32
      %149 = arith.addi %116, %c0_i32_118 : i32
      %150 = arith.index_cast %149 : i32 to index
      %c4 = arith.constant 4 : index
      %151 = memref.load %arg2[%150, %c4] : memref<2x8xi32, #tpu.memory_space<smem>>
      %c0_i32_119 = arith.constant 0 : i32
      %c0_i32_120 = arith.constant 0 : i32
      %152 = tpu.memref_slice %arg3[%151, %c0_i32_120] : memref<65x128xf32, #tpu.memory_space<any>> -> memref<1x128xf32, #tpu.memory_space<any>>
      %c4_i32_121 = arith.constant 4 : i32
      %c0_i32_122 = arith.constant 0 : i32
      %153 = tpu.memref_slice %arg5[%115, %c0_i32_119, %c4_i32_121, %c0_i32_122] : memref<2x2x8x128xf32, #tpu.memory_space<vmem>> -> memref<1x1x1x128xf32, #tpu.memory_space<vmem>>
      %154 = tpu.memref_squeeze %153 : memref<1x1x1x128xf32, #tpu.memory_space<vmem>> -> memref<1x128xf32, #tpu.memory_space<vmem>>
      %155 = tpu.memref_slice %arg6[%115] : memref<2x!tpu.dma_semaphore, #tpu.memory_space<semaphore_mem>> -> memref<1x!tpu.dma_semaphore, #tpu.memory_space<semaphore_mem>>
      %156 = tpu.memref_squeeze %155 : memref<1x!tpu.dma_semaphore, #tpu.memory_space<semaphore_mem>> -> memref<!tpu.dma_semaphore, #tpu.memory_space<semaphore_mem>>
      tpu.enqueue_dma source(%152 : memref<1x128xf32, #tpu.memory_space<any>>) target(%154 : memref<1x128xf32, #tpu.memory_space<vmem>>) target_semaphore(%156 : memref<!tpu.dma_semaphore, #tpu.memory_space<semaphore_mem>>)
      %c0_i32_123 = arith.constant 0 : i32
      %157 = arith.addi %116, %c0_i32_123 : i32
      %158 = arith.index_cast %157 : i32 to index
      %c5 = arith.constant 5 : index
      %159 = memref.load %arg2[%158, %c5] : memref<2x8xi32, #tpu.memory_space<smem>>
      %c0_i32_124 = arith.constant 0 : i32
      %c0_i32_125 = arith.constant 0 : i32
      %160 = tpu.memref_slice %arg3[%159, %c0_i32_125] : memref<65x128xf32, #tpu.memory_space<any>> -> memref<1x128xf32, #tpu.memory_space<any>>
      %c5_i32_126 = arith.constant 5 : i32
      %c0_i32_127 = arith.constant 0 : i32
      %161 = tpu.memref_slice %arg5[%115, %c0_i32_124, %c5_i32_126, %c0_i32_127] : memref<2x2x8x128xf32, #tpu.memory_space<vmem>> -> memref<1x1x1x128xf32, #tpu.memory_space<vmem>>
      %162 = tpu.memref_squeeze %161 : memref<1x1x1x128xf32, #tpu.memory_space<vmem>> -> memref<1x128xf32, #tpu.memory_space<vmem>>
      %163 = tpu.memref_slice %arg6[%115] : memref<2x!tpu.dma_semaphore, #tpu.memory_space<semaphore_mem>> -> memref<1x!tpu.dma_semaphore, #tpu.memory_space<semaphore_mem>>
      %164 = tpu.memref_squeeze %163 : memref<1x!tpu.dma_semaphore, #tpu.memory_space<semaphore_mem>> -> memref<!tpu.dma_semaphore, #tpu.memory_space<semaphore_mem>>
      tpu.enqueue_dma source(%160 : memref<1x128xf32, #tpu.memory_space<any>>) target(%162 : memref<1x128xf32, #tpu.memory_space<vmem>>) target_semaphore(%164 : memref<!tpu.dma_semaphore, #tpu.memory_space<semaphore_mem>>)
      %c0_i32_128 = arith.constant 0 : i32
      %165 = arith.addi %116, %c0_i32_128 : i32
      %166 = arith.index_cast %165 : i32 to index
      %c6 = arith.constant 6 : index
      %167 = memref.load %arg2[%166, %c6] : memref<2x8xi32, #tpu.memory_space<smem>>
      %c0_i32_129 = arith.constant 0 : i32
      %c0_i32_130 = arith.constant 0 : i32
      %168 = tpu.memref_slice %arg3[%167, %c0_i32_130] : memref<65x128xf32, #tpu.memory_space<any>> -> memref<1x128xf32, #tpu.memory_space<any>>
      %c6_i32_131 = arith.constant 6 : i32
      %c0_i32_132 = arith.constant 0 : i32
      %169 = tpu.memref_slice %arg5[%115, %c0_i32_129, %c6_i32_131, %c0_i32_132] : memref<2x2x8x128xf32, #tpu.memory_space<vmem>> -> memref<1x1x1x128xf32, #tpu.memory_space<vmem>>
      %170 = tpu.memref_squeeze %169 : memref<1x1x1x128xf32, #tpu.memory_space<vmem>> -> memref<1x128xf32, #tpu.memory_space<vmem>>
      %171 = tpu.memref_slice %arg6[%115] : memref<2x!tpu.dma_semaphore, #tpu.memory_space<semaphore_mem>> -> memref<1x!tpu.dma_semaphore, #tpu.memory_space<semaphore_mem>>
      %172 = tpu.memref_squeeze %171 : memref<1x!tpu.dma_semaphore, #tpu.memory_space<semaphore_mem>> -> memref<!tpu.dma_semaphore, #tpu.memory_space<semaphore_mem>>
      tpu.enqueue_dma source(%168 : memref<1x128xf32, #tpu.memory_space<any>>) target(%170 : memref<1x128xf32, #tpu.memory_space<vmem>>) target_semaphore(%172 : memref<!tpu.dma_semaphore, #tpu.memory_space<semaphore_mem>>)
      %c0_i32_133 = arith.constant 0 : i32
      %173 = arith.addi %116, %c0_i32_133 : i32
      %174 = arith.index_cast %173 : i32 to index
      %c7 = arith.constant 7 : index
      %175 = memref.load %arg2[%174, %c7] : memref<2x8xi32, #tpu.memory_space<smem>>
      %c0_i32_134 = arith.constant 0 : i32
      %c0_i32_135 = arith.constant 0 : i32
      %176 = tpu.memref_slice %arg3[%175, %c0_i32_135] : memref<65x128xf32, #tpu.memory_space<any>> -> memref<1x128xf32, #tpu.memory_space<any>>
      %c7_i32_136 = arith.constant 7 : i32
      %c0_i32_137 = arith.constant 0 : i32
      %177 = tpu.memref_slice %arg5[%115, %c0_i32_134, %c7_i32_136, %c0_i32_137] : memref<2x2x8x128xf32, #tpu.memory_space<vmem>> -> memref<1x1x1x128xf32, #tpu.memory_space<vmem>>
      %178 = tpu.memref_squeeze %177 : memref<1x1x1x128xf32, #tpu.memory_space<vmem>> -> memref<1x128xf32, #tpu.memory_space<vmem>>
      %179 = tpu.memref_slice %arg6[%115] : memref<2x!tpu.dma_semaphore, #tpu.memory_space<semaphore_mem>> -> memref<1x!tpu.dma_semaphore, #tpu.memory_space<semaphore_mem>>
      %180 = tpu.memref_squeeze %179 : memref<1x!tpu.dma_semaphore, #tpu.memory_space<semaphore_mem>> -> memref<!tpu.dma_semaphore, #tpu.memory_space<semaphore_mem>>
      tpu.enqueue_dma source(%176 : memref<1x128xf32, #tpu.memory_space<any>>) target(%178 : memref<1x128xf32, #tpu.memory_space<vmem>>) target_semaphore(%180 : memref<!tpu.dma_semaphore, #tpu.memory_space<semaphore_mem>>)
      %c1_i32_138 = arith.constant 1 : i32
      %181 = arith.addi %116, %c1_i32_138 : i32
      %182 = arith.index_cast %181 : i32 to index
      %c0_139 = arith.constant 0 : index
      %183 = memref.load %arg2[%182, %c0_139] : memref<2x8xi32, #tpu.memory_space<smem>>
      %c1_i32_140 = arith.constant 1 : i32
      %c0_i32_141 = arith.constant 0 : i32
      %184 = tpu.memref_slice %arg3[%183, %c0_i32_141] : memref<65x128xf32, #tpu.memory_space<any>> -> memref<1x128xf32, #tpu.memory_space<any>>
      %c0_i32_142 = arith.constant 0 : i32
      %c0_i32_143 = arith.constant 0 : i32
      %185 = tpu.memref_slice %arg5[%115, %c1_i32_140, %c0_i32_142, %c0_i32_143] : memref<2x2x8x128xf32, #tpu.memory_space<vmem>> -> memref<1x1x1x128xf32, #tpu.memory_space<vmem>>
      %186 = tpu.memref_squeeze %185 : memref<1x1x1x128xf32, #tpu.memory_space<vmem>> -> memref<1x128xf32, #tpu.memory_space<vmem>>
      %187 = tpu.memref_slice %arg6[%115] : memref<2x!tpu.dma_semaphore, #tpu.memory_space<semaphore_mem>> -> memref<1x!tpu.dma_semaphore, #tpu.memory_space<semaphore_mem>>
      %188 = tpu.memref_squeeze %187 : memref<1x!tpu.dma_semaphore, #tpu.memory_space<semaphore_mem>> -> memref<!tpu.dma_semaphore, #tpu.memory_space<semaphore_mem>>
      tpu.enqueue_dma source(%184 : memref<1x128xf32, #tpu.memory_space<any>>) target(%186 : memref<1x128xf32, #tpu.memory_space<vmem>>) target_semaphore(%188 : memref<!tpu.dma_semaphore, #tpu.memory_space<semaphore_mem>>)
      %c1_i32_144 = arith.constant 1 : i32
      %189 = arith.addi %116, %c1_i32_144 : i32
      %190 = arith.index_cast %189 : i32 to index
      %c1_145 = arith.constant 1 : index
      %191 = memref.load %arg2[%190, %c1_145] : memref<2x8xi32, #tpu.memory_space<smem>>
      %c1_i32_146 = arith.constant 1 : i32
      %c0_i32_147 = arith.constant 0 : i32
      %192 = tpu.memref_slice %arg3[%191, %c0_i32_147] : memref<65x128xf32, #tpu.memory_space<any>> -> memref<1x128xf32, #tpu.memory_space<any>>
      %c1_i32_148 = arith.constant 1 : i32
      %c0_i32_149 = arith.constant 0 : i32
      %193 = tpu.memref_slice %arg5[%115, %c1_i32_146, %c1_i32_148, %c0_i32_149] : memref<2x2x8x128xf32, #tpu.memory_space<vmem>> -> memref<1x1x1x128xf32, #tpu.memory_space<vmem>>
      %194 = tpu.memref_squeeze %193 : memref<1x1x1x128xf32, #tpu.memory_space<vmem>> -> memref<1x128xf32, #tpu.memory_space<vmem>>
      %195 = tpu.memref_slice %arg6[%115] : memref<2x!tpu.dma_semaphore, #tpu.memory_space<semaphore_mem>> -> memref<1x!tpu.dma_semaphore, #tpu.memory_space<semaphore_mem>>
      %196 = tpu.memref_squeeze %195 : memref<1x!tpu.dma_semaphore, #tpu.memory_space<semaphore_mem>> -> memref<!tpu.dma_semaphore, #tpu.memory_space<semaphore_mem>>
      tpu.enqueue_dma source(%192 : memref<1x128xf32, #tpu.memory_space<any>>) target(%194 : memref<1x128xf32, #tpu.memory_space<vmem>>) target_semaphore(%196 : memref<!tpu.dma_semaphore, #tpu.memory_space<semaphore_mem>>)
      %c1_i32_150 = arith.constant 1 : i32
      %197 = arith.addi %116, %c1_i32_150 : i32
      %198 = arith.index_cast %197 : i32 to index
      %c2_151 = arith.constant 2 : index
      %199 = memref.load %arg2[%198, %c2_151] : memref<2x8xi32, #tpu.memory_space<smem>>
      %c1_i32_152 = arith.constant 1 : i32
      %c0_i32_153 = arith.constant 0 : i32
      %200 = tpu.memref_slice %arg3[%199, %c0_i32_153] : memref<65x128xf32, #tpu.memory_space<any>> -> memref<1x128xf32, #tpu.memory_space<any>>
      %c2_i32_154 = arith.constant 2 : i32
      %c0_i32_155 = arith.constant 0 : i32
      %201 = tpu.memref_slice %arg5[%115, %c1_i32_152, %c2_i32_154, %c0_i32_155] : memref<2x2x8x128xf32, #tpu.memory_space<vmem>> -> memref<1x1x1x128xf32, #tpu.memory_space<vmem>>
      %202 = tpu.memref_squeeze %201 : memref<1x1x1x128xf32, #tpu.memory_space<vmem>> -> memref<1x128xf32, #tpu.memory_space<vmem>>
      %203 = tpu.memref_slice %arg6[%115] : memref<2x!tpu.dma_semaphore, #tpu.memory_space<semaphore_mem>> -> memref<1x!tpu.dma_semaphore, #tpu.memory_space<semaphore_mem>>
      %204 = tpu.memref_squeeze %203 : memref<1x!tpu.dma_semaphore, #tpu.memory_space<semaphore_mem>> -> memref<!tpu.dma_semaphore, #tpu.memory_space<semaphore_mem>>
      tpu.enqueue_dma source(%200 : memref<1x128xf32, #tpu.memory_space<any>>) target(%202 : memref<1x128xf32, #tpu.memory_space<vmem>>) target_semaphore(%204 : memref<!tpu.dma_semaphore, #tpu.memory_space<semaphore_mem>>)
      %c1_i32_156 = arith.constant 1 : i32
      %205 = arith.addi %116, %c1_i32_156 : i32
      %206 = arith.index_cast %205 : i32 to index
      %c3_157 = arith.constant 3 : index
      %207 = memref.load %arg2[%206, %c3_157] : memref<2x8xi32, #tpu.memory_space<smem>>
      %c1_i32_158 = arith.constant 1 : i32
      %c0_i32_159 = arith.constant 0 : i32
      %208 = tpu.memref_slice %arg3[%207, %c0_i32_159] : memref<65x128xf32, #tpu.memory_space<any>> -> memref<1x128xf32, #tpu.memory_space<any>>
      %c3_i32_160 = arith.constant 3 : i32
      %c0_i32_161 = arith.constant 0 : i32
      %209 = tpu.memref_slice %arg5[%115, %c1_i32_158, %c3_i32_160, %c0_i32_161] : memref<2x2x8x128xf32, #tpu.memory_space<vmem>> -> memref<1x1x1x128xf32, #tpu.memory_space<vmem>>
      %210 = tpu.memref_squeeze %209 : memref<1x1x1x128xf32, #tpu.memory_space<vmem>> -> memref<1x128xf32, #tpu.memory_space<vmem>>
      %211 = tpu.memref_slice %arg6[%115] : memref<2x!tpu.dma_semaphore, #tpu.memory_space<semaphore_mem>> -> memref<1x!tpu.dma_semaphore, #tpu.memory_space<semaphore_mem>>
      %212 = tpu.memref_squeeze %211 : memref<1x!tpu.dma_semaphore, #tpu.memory_space<semaphore_mem>> -> memref<!tpu.dma_semaphore, #tpu.memory_space<semaphore_mem>>
      tpu.enqueue_dma source(%208 : memref<1x128xf32, #tpu.memory_space<any>>) target(%210 : memref<1x128xf32, #tpu.memory_space<vmem>>) target_semaphore(%212 : memref<!tpu.dma_semaphore, #tpu.memory_space<semaphore_mem>>)
      %c1_i32_162 = arith.constant 1 : i32
      %213 = arith.addi %116, %c1_i32_162 : i32
      %214 = arith.index_cast %213 : i32 to index
      %c4_163 = arith.constant 4 : index
      %215 = memref.load %arg2[%214, %c4_163] : memref<2x8xi32, #tpu.memory_space<smem>>
      %c1_i32_164 = arith.constant 1 : i32
      %c0_i32_165 = arith.constant 0 : i32
      %216 = tpu.memref_slice %arg3[%215, %c0_i32_165] : memref<65x128xf32, #tpu.memory_space<any>> -> memref<1x128xf32, #tpu.memory_space<any>>
      %c4_i32_166 = arith.constant 4 : i32
      %c0_i32_167 = arith.constant 0 : i32
      %217 = tpu.memref_slice %arg5[%115, %c1_i32_164, %c4_i32_166, %c0_i32_167] : memref<2x2x8x128xf32, #tpu.memory_space<vmem>> -> memref<1x1x1x128xf32, #tpu.memory_space<vmem>>
      %218 = tpu.memref_squeeze %217 : memref<1x1x1x128xf32, #tpu.memory_space<vmem>> -> memref<1x128xf32, #tpu.memory_space<vmem>>
      %219 = tpu.memref_slice %arg6[%115] : memref<2x!tpu.dma_semaphore, #tpu.memory_space<semaphore_mem>> -> memref<1x!tpu.dma_semaphore, #tpu.memory_space<semaphore_mem>>
      %220 = tpu.memref_squeeze %219 : memref<1x!tpu.dma_semaphore, #tpu.memory_space<semaphore_mem>> -> memref<!tpu.dma_semaphore, #tpu.memory_space<semaphore_mem>>
      tpu.enqueue_dma source(%216 : memref<1x128xf32, #tpu.memory_space<any>>) target(%218 : memref<1x128xf32, #tpu.memory_space<vmem>>) target_semaphore(%220 : memref<!tpu.dma_semaphore, #tpu.memory_space<semaphore_mem>>)
      %c1_i32_168 = arith.constant 1 : i32
      %221 = arith.addi %116, %c1_i32_168 : i32
      %222 = arith.index_cast %221 : i32 to index
      %c5_169 = arith.constant 5 : index
      %223 = memref.load %arg2[%222, %c5_169] : memref<2x8xi32, #tpu.memory_space<smem>>
      %c1_i32_170 = arith.constant 1 : i32
      %c0_i32_171 = arith.constant 0 : i32
      %224 = tpu.memref_slice %arg3[%223, %c0_i32_171] : memref<65x128xf32, #tpu.memory_space<any>> -> memref<1x128xf32, #tpu.memory_space<any>>
      %c5_i32_172 = arith.constant 5 : i32
      %c0_i32_173 = arith.constant 0 : i32
      %225 = tpu.memref_slice %arg5[%115, %c1_i32_170, %c5_i32_172, %c0_i32_173] : memref<2x2x8x128xf32, #tpu.memory_space<vmem>> -> memref<1x1x1x128xf32, #tpu.memory_space<vmem>>
      %226 = tpu.memref_squeeze %225 : memref<1x1x1x128xf32, #tpu.memory_space<vmem>> -> memref<1x128xf32, #tpu.memory_space<vmem>>
      %227 = tpu.memref_slice %arg6[%115] : memref<2x!tpu.dma_semaphore, #tpu.memory_space<semaphore_mem>> -> memref<1x!tpu.dma_semaphore, #tpu.memory_space<semaphore_mem>>
      %228 = tpu.memref_squeeze %227 : memref<1x!tpu.dma_semaphore, #tpu.memory_space<semaphore_mem>> -> memref<!tpu.dma_semaphore, #tpu.memory_space<semaphore_mem>>
      tpu.enqueue_dma source(%224 : memref<1x128xf32, #tpu.memory_space<any>>) target(%226 : memref<1x128xf32, #tpu.memory_space<vmem>>) target_semaphore(%228 : memref<!tpu.dma_semaphore, #tpu.memory_space<semaphore_mem>>)
      %c1_i32_174 = arith.constant 1 : i32
      %229 = arith.addi %116, %c1_i32_174 : i32
      %230 = arith.index_cast %229 : i32 to index
      %c6_175 = arith.constant 6 : index
      %231 = memref.load %arg2[%230, %c6_175] : memref<2x8xi32, #tpu.memory_space<smem>>
      %c1_i32_176 = arith.constant 1 : i32
      %c0_i32_177 = arith.constant 0 : i32
      %232 = tpu.memref_slice %arg3[%231, %c0_i32_177] : memref<65x128xf32, #tpu.memory_space<any>> -> memref<1x128xf32, #tpu.memory_space<any>>
      %c6_i32_178 = arith.constant 6 : i32
      %c0_i32_179 = arith.constant 0 : i32
      %233 = tpu.memref_slice %arg5[%115, %c1_i32_176, %c6_i32_178, %c0_i32_179] : memref<2x2x8x128xf32, #tpu.memory_space<vmem>> -> memref<1x1x1x128xf32, #tpu.memory_space<vmem>>
      %234 = tpu.memref_squeeze %233 : memref<1x1x1x128xf32, #tpu.memory_space<vmem>> -> memref<1x128xf32, #tpu.memory_space<vmem>>
      %235 = tpu.memref_slice %arg6[%115] : memref<2x!tpu.dma_semaphore, #tpu.memory_space<semaphore_mem>> -> memref<1x!tpu.dma_semaphore, #tpu.memory_space<semaphore_mem>>
      %236 = tpu.memref_squeeze %235 : memref<1x!tpu.dma_semaphore, #tpu.memory_space<semaphore_mem>> -> memref<!tpu.dma_semaphore, #tpu.memory_space<semaphore_mem>>
      tpu.enqueue_dma source(%232 : memref<1x128xf32, #tpu.memory_space<any>>) target(%234 : memref<1x128xf32, #tpu.memory_space<vmem>>) target_semaphore(%236 : memref<!tpu.dma_semaphore, #tpu.memory_space<semaphore_mem>>)
      %c1_i32_180 = arith.constant 1 : i32
      %237 = arith.addi %116, %c1_i32_180 : i32
      %238 = arith.index_cast %237 : i32 to index
      %c7_181 = arith.constant 7 : index
      %239 = memref.load %arg2[%238, %c7_181] : memref<2x8xi32, #tpu.memory_space<smem>>
      %c1_i32_182 = arith.constant 1 : i32
      %c0_i32_183 = arith.constant 0 : i32
      %240 = tpu.memref_slice %arg3[%239, %c0_i32_183] : memref<65x128xf32, #tpu.memory_space<any>> -> memref<1x128xf32, #tpu.memory_space<any>>
      %c7_i32_184 = arith.constant 7 : i32
      %c0_i32_185 = arith.constant 0 : i32
      %241 = tpu.memref_slice %arg5[%115, %c1_i32_182, %c7_i32_184, %c0_i32_185] : memref<2x2x8x128xf32, #tpu.memory_space<vmem>> -> memref<1x1x1x128xf32, #tpu.memory_space<vmem>>
      %242 = tpu.memref_squeeze %241 : memref<1x1x1x128xf32, #tpu.memory_space<vmem>> -> memref<1x128xf32, #tpu.memory_space<vmem>>
      %243 = tpu.memref_slice %arg6[%115] : memref<2x!tpu.dma_semaphore, #tpu.memory_space<semaphore_mem>> -> memref<1x!tpu.dma_semaphore, #tpu.memory_space<semaphore_mem>>
      %244 = tpu.memref_squeeze %243 : memref<1x!tpu.dma_semaphore, #tpu.memory_space<semaphore_mem>> -> memref<!tpu.dma_semaphore, #tpu.memory_space<semaphore_mem>>
      tpu.enqueue_dma source(%240 : memref<1x128xf32, #tpu.memory_space<any>>) target(%242 : memref<1x128xf32, #tpu.memory_space<vmem>>) target_semaphore(%244 : memref<!tpu.dma_semaphore, #tpu.memory_space<semaphore_mem>>)
    } else {
    }
    %c2_i32 = arith.constant 2 : i32
    %c0_i32_4 = arith.constant 0 : i32
    %9 = arith.cmpi eq, %c2_i32, %c0_i32_4 : i32
    %c1_i32_5 = arith.constant 1 : i32
    %10 = arith.select %9, %c1_i32_5, %c2_i32 : i32
    %11 = arith.remsi %arg1, %10 : i32
    %c0_i32_6 = arith.constant 0 : i32
    %12 = arith.cmpi ne, %11, %c0_i32_6 : i32
    %c0_i32_7 = arith.constant 0 : i32
    %13 = arith.cmpi slt, %11, %c0_i32_7 : i32
    %c0_i32_8 = arith.constant 0 : i32
    %14 = arith.cmpi slt, %10, %c0_i32_8 : i32
    %15 = arith.xori %13, %14 : i1
    %16 = arith.andi %15, %12 : i1
    %17 = arith.addi %11, %10 : i32
    %18 = arith.select %16, %17, %11 : i32
    %c0_i32_9 = arith.constant 0 : i32
    %c0_i32_10 = arith.constant 0 : i32
    %c0_i32_11 = arith.constant 0 : i32
    %19 = tpu.memref_slice %arg3[%c0_i32_10, %c0_i32_11] : memref<65x128xf32, #tpu.memory_space<any>> -> memref<1x128xf32, #tpu.memory_space<any>>
    %c0_i32_12 = arith.constant 0 : i32
    %c0_i32_13 = arith.constant 0 : i32
    %20 = tpu.memref_slice %arg5[%18, %c0_i32_9, %c0_i32_12, %c0_i32_13] : memref<2x2x8x128xf32, #tpu.memory_space<vmem>> -> memref<1x1x1x128xf32, #tpu.memory_space<vmem>>
    %21 = tpu.memref_squeeze %20 : memref<1x1x1x128xf32, #tpu.memory_space<vmem>> -> memref<1x128xf32, #tpu.memory_space<vmem>>
    %22 = tpu.memref_slice %arg6[%18] : memref<2x!tpu.dma_semaphore, #tpu.memory_space<semaphore_mem>> -> memref<1x!tpu.dma_semaphore, #tpu.memory_space<semaphore_mem>>
    %23 = tpu.memref_squeeze %22 : memref<1x!tpu.dma_semaphore, #tpu.memory_space<semaphore_mem>> -> memref<!tpu.dma_semaphore, #tpu.memory_space<semaphore_mem>>
    tpu.wait_dma2 semaphore(%23 : memref<!tpu.dma_semaphore, #tpu.memory_space<semaphore_mem>>) src(%19 : memref<1x128xf32, #tpu.memory_space<any>>) dst(%21 : memref<1x128xf32, #tpu.memory_space<vmem>>)
    %c0_i32_14 = arith.constant 0 : i32
    %c0_i32_15 = arith.constant 0 : i32
    %c0_i32_16 = arith.constant 0 : i32
    %24 = tpu.memref_slice %arg3[%c0_i32_15, %c0_i32_16] : memref<65x128xf32, #tpu.memory_space<any>> -> memref<1x128xf32, #tpu.memory_space<any>>
    %c1_i32_17 = arith.constant 1 : i32
    %c0_i32_18 = arith.constant 0 : i32
    %25 = tpu.memref_slice %arg5[%18, %c0_i32_14, %c1_i32_17, %c0_i32_18] : memref<2x2x8x128xf32, #tpu.memory_space<vmem>> -> memref<1x1x1x128xf32, #tpu.memory_space<vmem>>
    %26 = tpu.memref_squeeze %25 : memref<1x1x1x128xf32, #tpu.memory_space<vmem>> -> memref<1x128xf32, #tpu.memory_space<vmem>>
    %27 = tpu.memref_slice %arg6[%18] : memref<2x!tpu.dma_semaphore, #tpu.memory_space<semaphore_mem>> -> memref<1x!tpu.dma_semaphore, #tpu.memory_space<semaphore_mem>>
    %28 = tpu.memref_squeeze %27 : memref<1x!tpu.dma_semaphore, #tpu.memory_space<semaphore_mem>> -> memref<!tpu.dma_semaphore, #tpu.memory_space<semaphore_mem>>
    tpu.wait_dma2 semaphore(%28 : memref<!tpu.dma_semaphore, #tpu.memory_space<semaphore_mem>>) src(%24 : memref<1x128xf32, #tpu.memory_space<any>>) dst(%26 : memref<1x128xf32, #tpu.memory_space<vmem>>)
    %c0_i32_19 = arith.constant 0 : i32
    %c0_i32_20 = arith.constant 0 : i32
    %c0_i32_21 = arith.constant 0 : i32
    %29 = tpu.memref_slice %arg3[%c0_i32_20, %c0_i32_21] : memref<65x128xf32, #tpu.memory_space<any>> -> memref<1x128xf32, #tpu.memory_space<any>>
    %c2_i32_22 = arith.constant 2 : i32
    %c0_i32_23 = arith.constant 0 : i32
    %30 = tpu.memref_slice %arg5[%18, %c0_i32_19, %c2_i32_22, %c0_i32_23] : memref<2x2x8x128xf32, #tpu.memory_space<vmem>> -> memref<1x1x1x128xf32, #tpu.memory_space<vmem>>
    %31 = tpu.memref_squeeze %30 : memref<1x1x1x128xf32, #tpu.memory_space<vmem>> -> memref<1x128xf32, #tpu.memory_space<vmem>>
    %32 = tpu.memref_slice %arg6[%18] : memref<2x!tpu.dma_semaphore, #tpu.memory_space<semaphore_mem>> -> memref<1x!tpu.dma_semaphore, #tpu.memory_space<semaphore_mem>>
    %33 = tpu.memref_squeeze %32 : memref<1x!tpu.dma_semaphore, #tpu.memory_space<semaphore_mem>> -> memref<!tpu.dma_semaphore, #tpu.memory_space<semaphore_mem>>
    tpu.wait_dma2 semaphore(%33 : memref<!tpu.dma_semaphore, #tpu.memory_space<semaphore_mem>>) src(%29 : memref<1x128xf32, #tpu.memory_space<any>>) dst(%31 : memref<1x128xf32, #tpu.memory_space<vmem>>)
    %c0_i32_24 = arith.constant 0 : i32
    %c0_i32_25 = arith.constant 0 : i32
    %c0_i32_26 = arith.constant 0 : i32
    %34 = tpu.memref_slice %arg3[%c0_i32_25, %c0_i32_26] : memref<65x128xf32, #tpu.memory_space<any>> -> memref<1x128xf32, #tpu.memory_space<any>>
    %c3_i32 = arith.constant 3 : i32
    %c0_i32_27 = arith.constant 0 : i32
    %35 = tpu.memref_slice %arg5[%18, %c0_i32_24, %c3_i32, %c0_i32_27] : memref<2x2x8x128xf32, #tpu.memory_space<vmem>> -> memref<1x1x1x128xf32, #tpu.memory_space<vmem>>
    %36 = tpu.memref_squeeze %35 : memref<1x1x1x128xf32, #tpu.memory_space<vmem>> -> memref<1x128xf32, #tpu.memory_space<vmem>>
    %37 = tpu.memref_slice %arg6[%18] : memref<2x!tpu.dma_semaphore, #tpu.memory_space<semaphore_mem>> -> memref<1x!tpu.dma_semaphore, #tpu.memory_space<semaphore_mem>>
    %38 = tpu.memref_squeeze %37 : memref<1x!tpu.dma_semaphore, #tpu.memory_space<semaphore_mem>> -> memref<!tpu.dma_semaphore, #tpu.memory_space<semaphore_mem>>
    tpu.wait_dma2 semaphore(%38 : memref<!tpu.dma_semaphore, #tpu.memory_space<semaphore_mem>>) src(%34 : memref<1x128xf32, #tpu.memory_space<any>>) dst(%36 : memref<1x128xf32, #tpu.memory_space<vmem>>)
    %c0_i32_28 = arith.constant 0 : i32
    %c0_i32_29 = arith.constant 0 : i32
    %c0_i32_30 = arith.constant 0 : i32
    %39 = tpu.memref_slice %arg3[%c0_i32_29, %c0_i32_30] : memref<65x128xf32, #tpu.memory_space<any>> -> memref<1x128xf32, #tpu.memory_space<any>>
    %c4_i32 = arith.constant 4 : i32
    %c0_i32_31 = arith.constant 0 : i32
    %40 = tpu.memref_slice %arg5[%18, %c0_i32_28, %c4_i32, %c0_i32_31] : memref<2x2x8x128xf32, #tpu.memory_space<vmem>> -> memref<1x1x1x128xf32, #tpu.memory_space<vmem>>
    %41 = tpu.memref_squeeze %40 : memref<1x1x1x128xf32, #tpu.memory_space<vmem>> -> memref<1x128xf32, #tpu.memory_space<vmem>>
    %42 = tpu.memref_slice %arg6[%18] : memref<2x!tpu.dma_semaphore, #tpu.memory_space<semaphore_mem>> -> memref<1x!tpu.dma_semaphore, #tpu.memory_space<semaphore_mem>>
    %43 = tpu.memref_squeeze %42 : memref<1x!tpu.dma_semaphore, #tpu.memory_space<semaphore_mem>> -> memref<!tpu.dma_semaphore, #tpu.memory_space<semaphore_mem>>
    tpu.wait_dma2 semaphore(%43 : memref<!tpu.dma_semaphore, #tpu.memory_space<semaphore_mem>>) src(%39 : memref<1x128xf32, #tpu.memory_space<any>>) dst(%41 : memref<1x128xf32, #tpu.memory_space<vmem>>)
    %c0_i32_32 = arith.constant 0 : i32
    %c0_i32_33 = arith.constant 0 : i32
    %c0_i32_34 = arith.constant 0 : i32
    %44 = tpu.memref_slice %arg3[%c0_i32_33, %c0_i32_34] : memref<65x128xf32, #tpu.memory_space<any>> -> memref<1x128xf32, #tpu.memory_space<any>>
    %c5_i32 = arith.constant 5 : i32
    %c0_i32_35 = arith.constant 0 : i32
    %45 = tpu.memref_slice %arg5[%18, %c0_i32_32, %c5_i32, %c0_i32_35] : memref<2x2x8x128xf32, #tpu.memory_space<vmem>> -> memref<1x1x1x128xf32, #tpu.memory_space<vmem>>
    %46 = tpu.memref_squeeze %45 : memref<1x1x1x128xf32, #tpu.memory_space<vmem>> -> memref<1x128xf32, #tpu.memory_space<vmem>>
    %47 = tpu.memref_slice %arg6[%18] : memref<2x!tpu.dma_semaphore, #tpu.memory_space<semaphore_mem>> -> memref<1x!tpu.dma_semaphore, #tpu.memory_space<semaphore_mem>>
    %48 = tpu.memref_squeeze %47 : memref<1x!tpu.dma_semaphore, #tpu.memory_space<semaphore_mem>> -> memref<!tpu.dma_semaphore, #tpu.memory_space<semaphore_mem>>
    tpu.wait_dma2 semaphore(%48 : memref<!tpu.dma_semaphore, #tpu.memory_space<semaphore_mem>>) src(%44 : memref<1x128xf32, #tpu.memory_space<any>>) dst(%46 : memref<1x128xf32, #tpu.memory_space<vmem>>)
    %c0_i32_36 = arith.constant 0 : i32
    %c0_i32_37 = arith.constant 0 : i32
    %c0_i32_38 = arith.constant 0 : i32
    %49 = tpu.memref_slice %arg3[%c0_i32_37, %c0_i32_38] : memref<65x128xf32, #tpu.memory_space<any>> -> memref<1x128xf32, #tpu.memory_space<any>>
    %c6_i32 = arith.constant 6 : i32
    %c0_i32_39 = arith.constant 0 : i32
    %50 = tpu.memref_slice %arg5[%18, %c0_i32_36, %c6_i32, %c0_i32_39] : memref<2x2x8x128xf32, #tpu.memory_space<vmem>> -> memref<1x1x1x128xf32, #tpu.memory_space<vmem>>
    %51 = tpu.memref_squeeze %50 : memref<1x1x1x128xf32, #tpu.memory_space<vmem>> -> memref<1x128xf32, #tpu.memory_space<vmem>>
    %52 = tpu.memref_slice %arg6[%18] : memref<2x!tpu.dma_semaphore, #tpu.memory_space<semaphore_mem>> -> memref<1x!tpu.dma_semaphore, #tpu.memory_space<semaphore_mem>>
    %53 = tpu.memref_squeeze %52 : memref<1x!tpu.dma_semaphore, #tpu.memory_space<semaphore_mem>> -> memref<!tpu.dma_semaphore, #tpu.memory_space<semaphore_mem>>
    tpu.wait_dma2 semaphore(%53 : memref<!tpu.dma_semaphore, #tpu.memory_space<semaphore_mem>>) src(%49 : memref<1x128xf32, #tpu.memory_space<any>>) dst(%51 : memref<1x128xf32, #tpu.memory_space<vmem>>)
    %c0_i32_40 = arith.constant 0 : i32
    %c0_i32_41 = arith.constant 0 : i32
    %c0_i32_42 = arith.constant 0 : i32
    %54 = tpu.memref_slice %arg3[%c0_i32_41, %c0_i32_42] : memref<65x128xf32, #tpu.memory_space<any>> -> memref<1x128xf32, #tpu.memory_space<any>>
    %c7_i32 = arith.constant 7 : i32
    %c0_i32_43 = arith.constant 0 : i32
    %55 = tpu.memref_slice %arg5[%18, %c0_i32_40, %c7_i32, %c0_i32_43] : memref<2x2x8x128xf32, #tpu.memory_space<vmem>> -> memref<1x1x1x128xf32, #tpu.memory_space<vmem>>
    %56 = tpu.memref_squeeze %55 : memref<1x1x1x128xf32, #tpu.memory_space<vmem>> -> memref<1x128xf32, #tpu.memory_space<vmem>>
    %57 = tpu.memref_slice %arg6[%18] : memref<2x!tpu.dma_semaphore, #tpu.memory_space<semaphore_mem>> -> memref<1x!tpu.dma_semaphore, #tpu.memory_space<semaphore_mem>>
    %58 = tpu.memref_squeeze %57 : memref<1x!tpu.dma_semaphore, #tpu.memory_space<semaphore_mem>> -> memref<!tpu.dma_semaphore, #tpu.memory_space<semaphore_mem>>
    tpu.wait_dma2 semaphore(%58 : memref<!tpu.dma_semaphore, #tpu.memory_space<semaphore_mem>>) src(%54 : memref<1x128xf32, #tpu.memory_space<any>>) dst(%56 : memref<1x128xf32, #tpu.memory_space<vmem>>)
    %c1_i32_44 = arith.constant 1 : i32
    %c0_i32_45 = arith.constant 0 : i32
    %c0_i32_46 = arith.constant 0 : i32
    %59 = tpu.memref_slice %arg3[%c0_i32_45, %c0_i32_46] : memref<65x128xf32, #tpu.memory_space<any>> -> memref<1x128xf32, #tpu.memory_space<any>>
    %c0_i32_47 = arith.constant 0 : i32
    %c0_i32_48 = arith.constant 0 : i32
    %60 = tpu.memref_slice %arg5[%18, %c1_i32_44, %c0_i32_47, %c0_i32_48] : memref<2x2x8x128xf32, #tpu.memory_space<vmem>> -> memref<1x1x1x128xf32, #tpu.memory_space<vmem>>
    %61 = tpu.memref_squeeze %60 : memref<1x1x1x128xf32, #tpu.memory_space<vmem>> -> memref<1x128xf32, #tpu.memory_space<vmem>>
    %62 = tpu.memref_slice %arg6[%18] : memref<2x!tpu.dma_semaphore, #tpu.memory_space<semaphore_mem>> -> memref<1x!tpu.dma_semaphore, #tpu.memory_space<semaphore_mem>>
    %63 = tpu.memref_squeeze %62 : memref<1x!tpu.dma_semaphore, #tpu.memory_space<semaphore_mem>> -> memref<!tpu.dma_semaphore, #tpu.memory_space<semaphore_mem>>
    tpu.wait_dma2 semaphore(%63 : memref<!tpu.dma_semaphore, #tpu.memory_space<semaphore_mem>>) src(%59 : memref<1x128xf32, #tpu.memory_space<any>>) dst(%61 : memref<1x128xf32, #tpu.memory_space<vmem>>)
    %c1_i32_49 = arith.constant 1 : i32
    %c0_i32_50 = arith.constant 0 : i32
    %c0_i32_51 = arith.constant 0 : i32
    %64 = tpu.memref_slice %arg3[%c0_i32_50, %c0_i32_51] : memref<65x128xf32, #tpu.memory_space<any>> -> memref<1x128xf32, #tpu.memory_space<any>>
    %c1_i32_52 = arith.constant 1 : i32
    %c0_i32_53 = arith.constant 0 : i32
    %65 = tpu.memref_slice %arg5[%18, %c1_i32_49, %c1_i32_52, %c0_i32_53] : memref<2x2x8x128xf32, #tpu.memory_space<vmem>> -> memref<1x1x1x128xf32, #tpu.memory_space<vmem>>
    %66 = tpu.memref_squeeze %65 : memref<1x1x1x128xf32, #tpu.memory_space<vmem>> -> memref<1x128xf32, #tpu.memory_space<vmem>>
    %67 = tpu.memref_slice %arg6[%18] : memref<2x!tpu.dma_semaphore, #tpu.memory_space<semaphore_mem>> -> memref<1x!tpu.dma_semaphore, #tpu.memory_space<semaphore_mem>>
    %68 = tpu.memref_squeeze %67 : memref<1x!tpu.dma_semaphore, #tpu.memory_space<semaphore_mem>> -> memref<!tpu.dma_semaphore, #tpu.memory_space<semaphore_mem>>
    tpu.wait_dma2 semaphore(%68 : memref<!tpu.dma_semaphore, #tpu.memory_space<semaphore_mem>>) src(%64 : memref<1x128xf32, #tpu.memory_space<any>>) dst(%66 : memref<1x128xf32, #tpu.memory_space<vmem>>)
    %c1_i32_54 = arith.constant 1 : i32
    %c0_i32_55 = arith.constant 0 : i32
    %c0_i32_56 = arith.constant 0 : i32
    %69 = tpu.memref_slice %arg3[%c0_i32_55, %c0_i32_56] : memref<65x128xf32, #tpu.memory_space<any>> -> memref<1x128xf32, #tpu.memory_space<any>>
    %c2_i32_57 = arith.constant 2 : i32
    %c0_i32_58 = arith.constant 0 : i32
    %70 = tpu.memref_slice %arg5[%18, %c1_i32_54, %c2_i32_57, %c0_i32_58] : memref<2x2x8x128xf32, #tpu.memory_space<vmem>> -> memref<1x1x1x128xf32, #tpu.memory_space<vmem>>
    %71 = tpu.memref_squeeze %70 : memref<1x1x1x128xf32, #tpu.memory_space<vmem>> -> memref<1x128xf32, #tpu.memory_space<vmem>>
    %72 = tpu.memref_slice %arg6[%18] : memref<2x!tpu.dma_semaphore, #tpu.memory_space<semaphore_mem>> -> memref<1x!tpu.dma_semaphore, #tpu.memory_space<semaphore_mem>>
    %73 = tpu.memref_squeeze %72 : memref<1x!tpu.dma_semaphore, #tpu.memory_space<semaphore_mem>> -> memref<!tpu.dma_semaphore, #tpu.memory_space<semaphore_mem>>
    tpu.wait_dma2 semaphore(%73 : memref<!tpu.dma_semaphore, #tpu.memory_space<semaphore_mem>>) src(%69 : memref<1x128xf32, #tpu.memory_space<any>>) dst(%71 : memref<1x128xf32, #tpu.memory_space<vmem>>)
    %c1_i32_59 = arith.constant 1 : i32
    %c0_i32_60 = arith.constant 0 : i32
    %c0_i32_61 = arith.constant 0 : i32
    %74 = tpu.memref_slice %arg3[%c0_i32_60, %c0_i32_61] : memref<65x128xf32, #tpu.memory_space<any>> -> memref<1x128xf32, #tpu.memory_space<any>>
    %c3_i32_62 = arith.constant 3 : i32
    %c0_i32_63 = arith.constant 0 : i32
    %75 = tpu.memref_slice %arg5[%18, %c1_i32_59, %c3_i32_62, %c0_i32_63] : memref<2x2x8x128xf32, #tpu.memory_space<vmem>> -> memref<1x1x1x128xf32, #tpu.memory_space<vmem>>
    %76 = tpu.memref_squeeze %75 : memref<1x1x1x128xf32, #tpu.memory_space<vmem>> -> memref<1x128xf32, #tpu.memory_space<vmem>>
    %77 = tpu.memref_slice %arg6[%18] : memref<2x!tpu.dma_semaphore, #tpu.memory_space<semaphore_mem>> -> memref<1x!tpu.dma_semaphore, #tpu.memory_space<semaphore_mem>>
    %78 = tpu.memref_squeeze %77 : memref<1x!tpu.dma_semaphore, #tpu.memory_space<semaphore_mem>> -> memref<!tpu.dma_semaphore, #tpu.memory_space<semaphore_mem>>
    tpu.wait_dma2 semaphore(%78 : memref<!tpu.dma_semaphore, #tpu.memory_space<semaphore_mem>>) src(%74 : memref<1x128xf32, #tpu.memory_space<any>>) dst(%76 : memref<1x128xf32, #tpu.memory_space<vmem>>)
    %c1_i32_64 = arith.constant 1 : i32
    %c0_i32_65 = arith.constant 0 : i32
    %c0_i32_66 = arith.constant 0 : i32
    %79 = tpu.memref_slice %arg3[%c0_i32_65, %c0_i32_66] : memref<65x128xf32, #tpu.memory_space<any>> -> memref<1x128xf32, #tpu.memory_space<any>>
    %c4_i32_67 = arith.constant 4 : i32
    %c0_i32_68 = arith.constant 0 : i32
    %80 = tpu.memref_slice %arg5[%18, %c1_i32_64, %c4_i32_67, %c0_i32_68] : memref<2x2x8x128xf32, #tpu.memory_space<vmem>> -> memref<1x1x1x128xf32, #tpu.memory_space<vmem>>
    %81 = tpu.memref_squeeze %80 : memref<1x1x1x128xf32, #tpu.memory_space<vmem>> -> memref<1x128xf32, #tpu.memory_space<vmem>>
    %82 = tpu.memref_slice %arg6[%18] : memref<2x!tpu.dma_semaphore, #tpu.memory_space<semaphore_mem>> -> memref<1x!tpu.dma_semaphore, #tpu.memory_space<semaphore_mem>>
    %83 = tpu.memref_squeeze %82 : memref<1x!tpu.dma_semaphore, #tpu.memory_space<semaphore_mem>> -> memref<!tpu.dma_semaphore, #tpu.memory_space<semaphore_mem>>
    tpu.wait_dma2 semaphore(%83 : memref<!tpu.dma_semaphore, #tpu.memory_space<semaphore_mem>>) src(%79 : memref<1x128xf32, #tpu.memory_space<any>>) dst(%81 : memref<1x128xf32, #tpu.memory_space<vmem>>)
    %c1_i32_69 = arith.constant 1 : i32
    %c0_i32_70 = arith.constant 0 : i32
    %c0_i32_71 = arith.constant 0 : i32
    %84 = tpu.memref_slice %arg3[%c0_i32_70, %c0_i32_71] : memref<65x128xf32, #tpu.memory_space<any>> -> memref<1x128xf32, #tpu.memory_space<any>>
    %c5_i32_72 = arith.constant 5 : i32
    %c0_i32_73 = arith.constant 0 : i32
    %85 = tpu.memref_slice %arg5[%18, %c1_i32_69, %c5_i32_72, %c0_i32_73] : memref<2x2x8x128xf32, #tpu.memory_space<vmem>> -> memref<1x1x1x128xf32, #tpu.memory_space<vmem>>
    %86 = tpu.memref_squeeze %85 : memref<1x1x1x128xf32, #tpu.memory_space<vmem>> -> memref<1x128xf32, #tpu.memory_space<vmem>>
    %87 = tpu.memref_slice %arg6[%18] : memref<2x!tpu.dma_semaphore, #tpu.memory_space<semaphore_mem>> -> memref<1x!tpu.dma_semaphore, #tpu.memory_space<semaphore_mem>>
    %88 = tpu.memref_squeeze %87 : memref<1x!tpu.dma_semaphore, #tpu.memory_space<semaphore_mem>> -> memref<!tpu.dma_semaphore, #tpu.memory_space<semaphore_mem>>
    tpu.wait_dma2 semaphore(%88 : memref<!tpu.dma_semaphore, #tpu.memory_space<semaphore_mem>>) src(%84 : memref<1x128xf32, #tpu.memory_space<any>>) dst(%86 : memref<1x128xf32, #tpu.memory_space<vmem>>)
    %c1_i32_74 = arith.constant 1 : i32
    %c0_i32_75 = arith.constant 0 : i32
    %c0_i32_76 = arith.constant 0 : i32
    %89 = tpu.memref_slice %arg3[%c0_i32_75, %c0_i32_76] : memref<65x128xf32, #tpu.memory_space<any>> -> memref<1x128xf32, #tpu.memory_space<any>>
    %c6_i32_77 = arith.constant 6 : i32
    %c0_i32_78 = arith.constant 0 : i32
    %90 = tpu.memref_slice %arg5[%18, %c1_i32_74, %c6_i32_77, %c0_i32_78] : memref<2x2x8x128xf32, #tpu.memory_space<vmem>> -> memref<1x1x1x128xf32, #tpu.memory_space<vmem>>
    %91 = tpu.memref_squeeze %90 : memref<1x1x1x128xf32, #tpu.memory_space<vmem>> -> memref<1x128xf32, #tpu.memory_space<vmem>>
    %92 = tpu.memref_slice %arg6[%18] : memref<2x!tpu.dma_semaphore, #tpu.memory_space<semaphore_mem>> -> memref<1x!tpu.dma_semaphore, #tpu.memory_space<semaphore_mem>>
    %93 = tpu.memref_squeeze %92 : memref<1x!tpu.dma_semaphore, #tpu.memory_space<semaphore_mem>> -> memref<!tpu.dma_semaphore, #tpu.memory_space<semaphore_mem>>
    tpu.wait_dma2 semaphore(%93 : memref<!tpu.dma_semaphore, #tpu.memory_space<semaphore_mem>>) src(%89 : memref<1x128xf32, #tpu.memory_space<any>>) dst(%91 : memref<1x128xf32, #tpu.memory_space<vmem>>)
    %c1_i32_79 = arith.constant 1 : i32
    %c0_i32_80 = arith.constant 0 : i32
    %c0_i32_81 = arith.constant 0 : i32
    %94 = tpu.memref_slice %arg3[%c0_i32_80, %c0_i32_81] : memref<65x128xf32, #tpu.memory_space<any>> -> memref<1x128xf32, #tpu.memory_space<any>>
    %c7_i32_82 = arith.constant 7 : i32
    %c0_i32_83 = arith.constant 0 : i32
    %95 = tpu.memref_slice %arg5[%18, %c1_i32_79, %c7_i32_82, %c0_i32_83] : memref<2x2x8x128xf32, #tpu.memory_space<vmem>> -> memref<1x1x1x128xf32, #tpu.memory_space<vmem>>
    %96 = tpu.memref_squeeze %95 : memref<1x1x1x128xf32, #tpu.memory_space<vmem>> -> memref<1x128xf32, #tpu.memory_space<vmem>>
    %97 = tpu.memref_slice %arg6[%18] : memref<2x!tpu.dma_semaphore, #tpu.memory_space<semaphore_mem>> -> memref<1x!tpu.dma_semaphore, #tpu.memory_space<semaphore_mem>>
    %98 = tpu.memref_squeeze %97 : memref<1x!tpu.dma_semaphore, #tpu.memory_space<semaphore_mem>> -> memref<!tpu.dma_semaphore, #tpu.memory_space<semaphore_mem>>
    tpu.wait_dma2 semaphore(%98 : memref<!tpu.dma_semaphore, #tpu.memory_space<semaphore_mem>>) src(%94 : memref<1x128xf32, #tpu.memory_space<any>>) dst(%96 : memref<1x128xf32, #tpu.memory_space<vmem>>)
    %99 = arith.index_cast %18 : i32 to index
    %c0 = arith.constant 0 : index
    %c0_84 = arith.constant 0 : index
    %c0_85 = arith.constant 0 : index
    %100 = vector.load %arg5[%99, %c0, %c0_84, %c0_85] : memref<2x2x8x128xf32, #tpu.memory_space<vmem>>, vector<1x2x8x128xf32>
    %101 = vector.shape_cast %100 : vector<1x2x8x128xf32> to vector<2x8x128xf32>
    %cst = arith.constant dense<0xFF800000> : vector<2x128xf32>
    %102 = vector.multi_reduction <maximumf>, %101, %cst [1] : vector<2x8x128xf32> to vector<2x128xf32>
    %c0_86 = arith.constant 0 : index
    %c0_87 = arith.constant 0 : index
    %103 = vector.load %arg4[%c0_86, %c0_87] : memref<2x128xf32, #tpu.memory_space<vmem>>, vector<2x128xf32>
    tpu.vector_store %arg4[%c0_86, %c0_87], %102 {strides = array<i32>} : memref<2x128xf32, #tpu.memory_space<vmem>>, vector<2x128xf32>,
    return
  }
  func.func @transform_1(%arg0: i32, %arg1: i32, %arg2: memref<2x8xi32, #tpu.memory_space<smem>>) -> (i32, i32) {
    %c1_i32 = arith.constant 1 : i32
    %0 = arith.muli %arg0, %c1_i32 : i32
    %1 = arith.addi %0, %arg1 : i32
    %c0_i32 = arith.constant 0 : i32
    %c0_i32_0 = arith.constant 0 : i32
    return %1, %c0_i32 : i32, i32
  }
}

</mosaic_0001>

<llo_original>
// kernel: tpu_custom_call.1
$region0: #{tpu_custom_call.1}
  #allocation0 [shape = 'u32[]', space=smem, size = 0x4, offset = 0x4, fixed_abs, tag = 'smem constant byte address 0x4 - core index']
  #allocation1 [shape = 'u32[72,128]{1,0:T(1,128)}', space=vmem, size = 0x9000, scoped, tag = 'internal scratch']
  #allocation2 [shape = 'f32[2,2,8,128]{3,2,1,0:T(8,128)}', space=vmem, size = 0x4000, scoped, tag = 'scratch operand']
  #allocation3 [shape = 's32[2]{0}', space=sflag, size = 0x8, scoped, tag = 'scratch operand']
  #allocation4 [shape = 's32[1]{0}', space=sflag, size = 0x4, scoped, tag = 'scoped memory for tpu_custom_call.1']
  #allocation5 [shape = 'u8[1024]{0}', space=smem, size = 0x400, scoped, tag = 'prefetched SMEM operand 0']
  #allocation8 [shape = 's32[]', space=sflag, size = 0x4, offset = 0, fixed_abs, tag = 'sflag constant byte address 0x0 - dummy sync flag']
  #allocation9 [shape = 's32[]', space=sflag, size = 0x4, offset = 0, fixed_abs, tag = 'sflag constant byte address 0x0 - dummy sync flag']
  #allocation10 [shape = 'u32[]', space=smem, size = 0x4, offset = 0x44, fixed_abs, tag = 'smem constant byte address 0x44 - assertion arg 0']
  #allocation11 [shape = 'u32[]', space=smem, size = 0x4, offset = 0x48, fixed_abs, tag = 'smem constant byte address 0x48 - assertion arg 1']
  #allocation12 [shape = 's32[]', space=sflag, size = 0x4, offset = 0, fixed_abs, tag = 'sflag constant byte address 0x0 - dummy sync flag']
  #allocation13 [shape = 's32[]', space=sflag, size = 0x4, offset = 0, fixed_abs, tag = 'sflag constant byte address 0x0 - dummy sync flag']
  #allocation14 [shape = 's32[]', space=sflag, size = 0x4, offset = 0, fixed_abs, tag = 'sflag constant byte address 0x0 - dummy sync flag']
  #allocation15 [shape = 's32[]', space=sflag, size = 0x4, offset = 0, fixed_abs, tag = 'sflag constant byte address 0x0 - dummy sync flag']
  #allocation16 [shape = 's32[]', space=sflag, size = 0x4, offset = 0, fixed_abs, tag = 'sflag constant byte address 0x0 - dummy sync flag']
  #allocation17 [shape = 's32[]', space=sflag, size = 0x4, offset = 0, fixed_abs, tag = 'sflag constant byte address 0x0 - dummy sync flag']
  #allocation18 [shape = 's32[]', space=sflag, size = 0x4, offset = 0, fixed_abs, tag = 'sflag constant byte address 0x0 - dummy sync flag']
  #allocation19 [shape = 's32[]', space=sflag, size = 0x4, offset = 0, fixed_abs, tag = 'sflag constant byte address 0x0 - dummy sync flag']
  #allocation20 [shape = 's32[]', space=sflag, size = 0x4, offset = 0, fixed_abs, tag = 'sflag constant byte address 0x0 - dummy sync flag']
  #allocation21 [shape = 's32[]', space=sflag, size = 0x4, offset = 0, fixed_abs, tag = 'sflag constant byte address 0x0 - dummy sync flag']
  #allocation22 [shape = 's32[]', space=sflag, size = 0x4, offset = 0, fixed_abs, tag = 'sflag constant byte address 0x0 - dummy sync flag']
  #allocation23 [shape = 's32[]', space=sflag, size = 0x4, offset = 0, fixed_abs, tag = 'sflag constant byte address 0x0 - dummy sync flag']
  #allocation24 [shape = 's32[]', space=sflag, size = 0x4, offset = 0, fixed_abs, tag = 'sflag constant byte address 0x0 - dummy sync flag']
  #allocation25 [shape = 's32[]', space=sflag, size = 0x4, offset = 0, fixed_abs, tag = 'sflag constant byte address 0x0 - dummy sync flag']
  #allocation26 [shape = 's32[]', space=sflag, size = 0x4, offset = 0, fixed_abs, tag = 'sflag constant byte address 0x0 - dummy sync flag']
  #allocation27 [shape = 's32[]', space=sflag, size = 0x4, offset = 0, fixed_abs, tag = 'sflag constant byte address 0x0 - dummy sync flag']
  #allocation28 [shape = 's32[]', space=sflag, size = 0x4, offset = 0, fixed_abs, tag = 'sflag constant byte address 0x0 - dummy sync flag']
  #allocation29 [shape = 's32[]', space=sflag, size = 0x4, offset = 0, fixed_abs, tag = 'sflag constant byte address 0x0 - dummy sync flag']
  #allocation30 [shape = 's32[]', space=sflag, size = 0x4, offset = 0, fixed_abs, tag = 'sflag constant byte address 0x0 - dummy sync flag']
  #allocation31 [shape = 's32[]', space=sflag, size = 0x4, offset = 0, fixed_abs, tag = 'sflag constant byte address 0x0 - dummy sync flag']
  #allocation32 [shape = 's32[]', space=sflag, size = 0x4, offset = 0, fixed_abs, tag = 'sflag constant byte address 0x0 - dummy sync flag']
  #allocation33 [shape = 's32[]', space=sflag, size = 0x4, offset = 0, fixed_abs, tag = 'sflag constant byte address 0x0 - dummy sync flag']
  #allocation34 [shape = 's32[]', space=sflag, size = 0x4, offset = 0, fixed_abs, tag = 'sflag constant byte address 0x0 - dummy sync flag']
  #allocation35 [shape = 's32[]', space=sflag, size = 0x4, offset = 0, fixed_abs, tag = 'sflag constant byte address 0x0 - dummy sync flag']
  #allocation36 [shape = 's32[]', space=sflag, size = 0x4, offset = 0, fixed_abs, tag = 'sflag constant byte address 0x0 - dummy sync flag']
  #allocation37 [shape = 's32[]', space=sflag, size = 0x4, offset = 0, fixed_abs, tag = 'sflag constant byte address 0x0 - dummy sync flag']
  #allocation38 [shape = 's32[]', space=sflag, size = 0x4, offset = 0, fixed_abs, tag = 'sflag constant byte address 0x0 - dummy sync flag']
  #allocation39 [shape = 's32[]', space=sflag, size = 0x4, offset = 0, fixed_abs, tag = 'sflag constant byte address 0x0 - dummy sync flag']
  #allocation40 [shape = 's32[]', space=sflag, size = 0x4, offset = 0, fixed_abs, tag = 'sflag constant byte address 0x0 - dummy sync flag']
  #allocation41 [shape = 's32[]', space=sflag, size = 0x4, offset = 0, fixed_abs, tag = 'sflag constant byte address 0x0 - dummy sync flag']
  #allocation42 [shape = 's32[]', space=sflag, size = 0x4, offset = 0, fixed_abs, tag = 'sflag constant byte address 0x0 - dummy sync flag']
  #allocation43 [shape = 's32[]', space=sflag, size = 0x4, offset = 0, fixed_abs, tag = 'sflag constant byte address 0x0 - dummy sync flag']
  #allocation44 [shape = 's32[]', space=sflag, size = 0x4, offset = 0, fixed_abs, tag = 'sflag constant byte address 0x0 - dummy sync flag']
  #allocation45 [shape = 's32[]', space=sflag, size = 0x4, offset = 0, fixed_abs, tag = 'sflag constant byte address 0x0 - dummy sync flag']
  #allocation46 [shape = 's32[]', space=sflag, size = 0x4, offset = 0, fixed_abs, tag = 'sflag constant byte address 0x0 - dummy sync flag']
  #allocation47 [shape = 's32[]', space=sflag, size = 0x4, offset = 0, fixed_abs, tag = 'sflag constant byte address 0x0 - dummy sync flag']
  #allocation48 [shape = 's32[]', space=sflag, size = 0x4, offset = 0, fixed_abs, tag = 'sflag constant byte address 0x0 - dummy sync flag']
  #allocation49 [shape = 's32[]', space=sflag, size = 0x4, offset = 0, fixed_abs, tag = 'sflag constant byte address 0x0 - dummy sync flag']
  #allocation50 [shape = 's32[]', space=sflag, size = 0x4, offset = 0, fixed_abs, tag = 'sflag constant byte address 0x0 - dummy sync flag']
  #allocation51 [shape = 's32[]', space=sflag, size = 0x4, offset = 0, fixed_abs, tag = 'sflag constant byte address 0x0 - dummy sync flag']
  #allocation52 [shape = 's32[]', space=sflag, size = 0x4, offset = 0, fixed_abs, tag = 'sflag constant byte address 0x0 - dummy sync flag']
  #allocation53 [shape = 's32[]', space=sflag, size = 0x4, offset = 0, fixed_abs, tag = 'sflag constant byte address 0x0 - dummy sync flag']
  #allocation54 [shape = 's32[]', space=sflag, size = 0x4, offset = 0, fixed_abs, tag = 'sflag constant byte address 0x0 - dummy sync flag']
  #allocation55 [shape = 's32[]', space=sflag, size = 0x4, offset = 0, fixed_abs, tag = 'sflag constant byte address 0x0 - dummy sync flag']
  #allocation56 [shape = 's32[]', space=sflag, size = 0x4, offset = 0, fixed_abs, tag = 'sflag constant byte address 0x0 - dummy sync flag']
  #allocation57 [shape = 's32[]', space=sflag, size = 0x4, offset = 0, fixed_abs, tag = 'sflag constant byte address 0x0 - dummy sync flag']
  #allocation58 [shape = 's32[]', space=sflag, size = 0x4, offset = 0, fixed_abs, tag = 'sflag constant byte address 0x0 - dummy sync flag']
  #allocation59 [shape = 's32[]', space=sflag, size = 0x4, offset = 0, fixed_abs, tag = 'sflag constant byte address 0x0 - dummy sync flag']
  #allocation60 [shape = 's32[]', space=sflag, size = 0x4, offset = 0, fixed_abs, tag = 'sflag constant byte address 0x0 - dummy sync flag']
  #allocation61 [shape = 's32[]', space=sflag, size = 0x4, offset = 0, fixed_abs, tag = 'sflag constant byte address 0x0 - dummy sync flag']
  #allocation62 [shape = 's32[]', space=sflag, size = 0x4, offset = 0, fixed_abs, tag = 'sflag constant byte address 0x0 - dummy sync flag']
  #allocation63 [shape = 's32[]', space=sflag, size = 0x4, offset = 0, fixed_abs, tag = 'sflag constant byte address 0x0 - dummy sync flag']
  #allocation64 [shape = 's32[]', space=sflag, size = 0x4, offset = 0, fixed_abs, tag = 'sflag constant byte address 0x0 - dummy sync flag']
  #allocation65 [shape = 's32[]', space=sflag, size = 0x4, offset = 0, fixed_abs, tag = 'sflag constant byte address 0x0 - dummy sync flag']
  #allocation66 [shape = 's32[]', space=sflag, size = 0x4, offset = 0, fixed_abs, tag = 'sflag constant byte address 0x0 - dummy sync flag']
  #allocation67 [shape = 's32[]', space=sflag, size = 0x4, offset = 0, fixed_abs, tag = 'sflag constant byte address 0x0 - dummy sync flag']
  #allocation68 [shape = 's32[]', space=sflag, size = 0x4, offset = 0, fixed_abs, tag = 'sflag constant byte address 0x0 - dummy sync flag']
  #allocation69 [shape = 's32[]', space=sflag, size = 0x4, offset = 0, fixed_abs, tag = 'sflag constant byte address 0x0 - dummy sync flag']
  #allocation70 [shape = 's32[]', space=sflag, size = 0x4, offset = 0, fixed_abs, tag = 'sflag constant byte address 0x0 - dummy sync flag']
  #allocation71 [shape = 's32[]', space=sflag, size = 0x4, offset = 0, fixed_abs, tag = 'sflag constant byte address 0x0 - dummy sync flag']
  #allocation72 [shape = 's32[]', space=sflag, size = 0x4, offset = 0, fixed_abs, tag = 'sflag constant byte address 0x0 - dummy sync flag']
  #allocation73 [shape = 's32[]', space=sflag, size = 0x4, offset = 0, fixed_abs, tag = 'sflag constant byte address 0x0 - dummy sync flag']
  %s0 = inlined_call_operand.hbm [shape: s32[2,8], index: 0, kind: input, shape index: {}]
  %s1 = inlined_call_operand.hbm [shape: f32[65,128], index: 1, kind: input, shape index: {}]
  %s2 = inlined_call_operand.hbm [shape: f32[2,128], index: 2, kind: output, shape index: {}]
  %s3 = sld [smem:[#allocation0]]
  $region146: #{tpu_custom_call.1} parent=0
    _
  %s5 = ssub.s32 1, %s3
  %s6 = scalar_select 0, %s5, %s3
  %s8 = sshll.u32 %s0, 4
  %s9 = int_to_ptr.hbm [resolvable:$true] %s8
  %11 = dma.hbm_to_smem %s9, 32, [#allocation5], [#allocation4]
  %13 = dma.done [#allocation4], 32
  %14 = sfence
  $region1: #{tpu_custom_call.1} parent=0
    #allocation6 [shape = 'u8[1024]{0}', space=vmem, size = 0x400, scoped, tag = 'output window, operand 0, single buffered']
    #allocation7 [shape = 's32[1]{0}', space=sflag, size = 0x4, scoped, tag = 'scoped memory for tpu_custom_call.1']
    %15 = vsyncpa [#allocation7], 0
    %s16 = sadd.s32 0, 0
    %s17 = sadd.s32 0, 0
    %p18 = scmp.eq.s32.totalorder 0, 0
    // Predicated region
    $region2: #{tpu_custom_call.1} parent=1 // pred_check
      %p19 = pneg %p18
    $region3: #{tpu_custom_call.1} parent=1 // pred_check_branch
      %21 = sbr.rel (%p19) target = $region5
    $region4: #{tpu_custom_call.1} parent=1 // pred_region
      %s22 = smul.u32 %s17, 2
      %s23 = smul.u32 %s22, 128
      %s24 = sld [smem:[#allocation5 + %s23]]
      %s25 = scalar_lea.hbm %s1, %s24
      // Predicated region
      $region6: #{tpu_custom_call.1} parent=4 // pred_check
        _
      $region7: #{tpu_custom_call.1} parent=4 // pred_check_branch
        %27 = sbr.rel target = $region9
      $region8: #{tpu_custom_call.1} parent=4 // pred_region
        %28 = sst [smem:[#allocation10]] [#allocation9]
        %29 = sst [smem:[#allocation11]] [#allocation8]
      $region9: #{tpu_custom_call.1} parent=4 // pred_fallthru
        _
      %31 = shalt.err (0)
      %s33 = sshll.u32 %s25, 4
      %s34 = int_to_ptr.hbm [resolvable:$true] %s33
      %s35 = sshll.u32 [#allocation2], 4
      %s36 = int_to_ptr.vmem [resolvable:$true] %s35
      %38 = dma.hbm_to_vmem [thread:$0]  %s34, 16, %s36, [#allocation3]
      %s39 = sadd.s32 %s23, 1
      %s40 = sld [smem:[#allocation5 + %s39]]
      %s41 = scalar_lea.hbm %s1, %s40
      %s42 = scalar_lea.vmem [#allocation2], 1
      // Predicated region
      $region10: #{tpu_custom_call.1} parent=4 // pred_check
        _
      $region11: #{tpu_custom_call.1} parent=4 // pred_check_branch
        %44 = sbr.rel target = $region13
      $region12: #{tpu_custom_call.1} parent=4 // pred_region
        %45 = sst [smem:[#allocation10]] [#allocation13]
        %46 = sst [smem:[#allocation11]] [#allocation12]
      $region13: #{tpu_custom_call.1} parent=4 // pred_fallthru
        _
      %48 = shalt.err (0)
      %s50 = sshll.u32 %s41, 4
      %s51 = int_to_ptr.hbm [resolvable:$true] %s50
      %s52 = sshll.u32 %s42, 4
      %s53 = int_to_ptr.vmem [resolvable:$true] %s52
      %55 = dma.hbm_to_vmem [thread:$0]  %s51, 16, %s53, [#allocation3]
      %s56 = sadd.s32 %s23, 2
      %s57 = sld [smem:[#allocation5 + %s56]]
      %s58 = scalar_lea.hbm %s1, %s57
      %s59 = scalar_lea.vmem [#allocation2], 2
      // Predicated region
      $region14: #{tpu_custom_call.1} parent=4 // pred_check
        _
      $region15: #{tpu_custom_call.1} parent=4 // pred_check_branch
        %61 = sbr.rel target = $region17
      $region16: #{tpu_custom_call.1} parent=4 // pred_region
        %62 = sst [smem:[#allocation10]] [#allocation15]
        %63 = sst [smem:[#allocation11]] [#allocation14]
      $region17: #{tpu_custom_call.1} parent=4 // pred_fallthru
        _
      %65 = shalt.err (0)
      %s67 = sshll.u32 %s58, 4
      %s68 = int_to_ptr.hbm [resolvable:$true] %s67
      %s69 = sshll.u32 %s59, 4
      %s70 = int_to_ptr.vmem [resolvable:$true] %s69
      %72 = dma.hbm_to_vmem [thread:$0]  %s68, 16, %s70, [#allocation3]
      %s73 = sadd.s32 %s23, 3
      %s74 = sld [smem:[#allocation5 + %s73]]
      %s75 = scalar_lea.hbm %s1, %s74
      %s76 = scalar_lea.vmem [#allocation2], 3
      // Predicated region
      $region18: #{tpu_custom_call.1} parent=4 // pred_check
        _
      $region19: #{tpu_custom_call.1} parent=4 // pred_check_branch
        %78 = sbr.rel target = $region21
      $region20: #{tpu_custom_call.1} parent=4 // pred_region
        %79 = sst [smem:[#allocation10]] [#allocation17]
        %80 = sst [smem:[#allocation11]] [#allocation16]
      $region21: #{tpu_custom_call.1} parent=4 // pred_fallthru
        _
      %82 = shalt.err (0)
      %s84 = sshll.u32 %s75, 4
      %s85 = int_to_ptr.hbm [resolvable:$true] %s84
      %s86 = sshll.u32 %s76, 4
      %s87 = int_to_ptr.vmem [resolvable:$true] %s86
      %89 = dma.hbm_to_vmem [thread:$0]  %s85, 16, %s87, [#allocation3]
      %s90 = sadd.s32 %s23, 4
      %s91 = sld [smem:[#allocation5 + %s90]]
      %s92 = scalar_lea.hbm %s1, %s91
      %s93 = scalar_lea.vmem [#allocation2], 4
      // Predicated region
      $region22: #{tpu_custom_call.1} parent=4 // pred_check
        _
      $region23: #{tpu_custom_call.1} parent=4 // pred_check_branch
        %95 = sbr.rel target = $region25
      $region24: #{tpu_custom_call.1} parent=4 // pred_region
        %96 = sst [smem:[#allocation10]] [#allocation19]
        %97 = sst [smem:[#allocation11]] [#allocation18]
      $region25: #{tpu_custom_call.1} parent=4 // pred_fallthru
        _
      %99 = shalt.err (0)
      %s101 = sshll.u32 %s92, 4
      %s102 = int_to_ptr.hbm [resolvable:$true] %s101
      %s103 = sshll.u32 %s93, 4
      %s104 = int_to_ptr.vmem [resolvable:$true] %s103
      %106 = dma.hbm_to_vmem [thread:$0]  %s102, 16, %s104, [#allocation3]
      %s107 = sadd.s32 %s23, 5
      %s108 = sld [smem:[#allocation5 + %s107]]
      %s109 = scalar_lea.hbm %s1, %s108
      %s110 = scalar_lea.vmem [#allocation2], 5
      // Predicated region
      $region26: #{tpu_custom_call.1} parent=4 // pred_check
        _
      $region27: #{tpu_custom_call.1} parent=4 // pred_check_branch
        %112 = sbr.rel target = $region29
      $region28: #{tpu_custom_call.1} parent=4 // pred_region
        %113 = sst [smem:[#allocation10]] [#allocation21]
        %114 = sst [smem:[#allocation11]] [#allocation20]
      $region29: #{tpu_custom_call.1} parent=4 // pred_fallthru
        _
      %116 = shalt.err (0)
      %s118 = sshll.u32 %s109, 4
      %s119 = int_to_ptr.hbm [resolvable:$true] %s118
      %s120 = sshll.u32 %s110, 4
      %s121 = int_to_ptr.vmem [resolvable:$true] %s120
      %123 = dma.hbm_to_vmem [thread:$0]  %s119, 16, %s121, [#allocation3]
      %s124 = sadd.s32 %s23, 6
      %s125 = sld [smem:[#allocation5 + %s124]]
      %s126 = scalar_lea.hbm %s1, %s125
      %s127 = scalar_lea.vmem [#allocation2], 6
      // Predicated region
      $region30: #{tpu_custom_call.1} parent=4 // pred_check
        _
      $region31: #{tpu_custom_call.1} parent=4 // pred_check_branch
        %129 = sbr.rel target = $region33
      $region32: #{tpu_custom_call.1} parent=4 // pred_region
        %130 = sst [smem:[#allocation10]] [#allocation23]
        %131 = sst [smem:[#allocation11]] [#allocation22]
      $region33: #{tpu_custom_call.1} parent=4 // pred_fallthru
        _
      %133 = shalt.err (0)
      %s135 = sshll.u32 %s126, 4
      %s136 = int_to_ptr.hbm [resolvable:$true] %s135
      %s137 = sshll.u32 %s127, 4
      %s138 = int_to_ptr.vmem [resolvable:$true] %s137
      %140 = dma.hbm_to_vmem [thread:$0]  %s136, 16, %s138, [#allocation3]
      %s141 = sadd.s32 %s23, 7
      %s142 = sld [smem:[#allocation5 + %s141]]
      %s143 = scalar_lea.hbm %s1, %s142
      %s144 = scalar_lea.vmem [#allocation2], 7
      // Predicated region
      $region34: #{tpu_custom_call.1} parent=4 // pred_check
        _
      $region35: #{tpu_custom_call.1} parent=4 // pred_check_branch
        %146 = sbr.rel target = $region37
      $region36: #{tpu_custom_call.1} parent=4 // pred_region
        %147 = sst [smem:[#allocation10]] [#allocation25]
        %148 = sst [smem:[#allocation11]] [#allocation24]
      $region37: #{tpu_custom_call.1} parent=4 // pred_fallthru
        _
      %150 = shalt.err (0)
      %s152 = sshll.u32 %s143, 4
      %s153 = int_to_ptr.hbm [resolvable:$true] %s152
      %s154 = sshll.u32 %s144, 4
      %s155 = int_to_ptr.vmem [resolvable:$true] %s154
      %157 = dma.hbm_to_vmem [thread:$0]  %s153, 16, %s155, [#allocation3]
      %s158 = sadd.s32 %s22, 1
      %s159 = smul.u32 %s158, 128
      %s160 = sld [smem:[#allocation5 + %s159]]
      %s161 = scalar_lea.hbm %s1, %s160
      %s162 = scalar_lea.vmem [#allocation2], 8
      // Predicated region
      $region38: #{tpu_custom_call.1} parent=4 // pred_check
        _
      $region39: #{tpu_custom_call.1} parent=4 // pred_check_branch
        %164 = sbr.rel target = $region41
      $region40: #{tpu_custom_call.1} parent=4 // pred_region
        %165 = sst [smem:[#allocation10]] [#allocation27]
        %166 = sst [smem:[#allocation11]] [#allocation26]
      $region41: #{tpu_custom_call.1} parent=4 // pred_fallthru
        _
      %168 = shalt.err (0)
      %s170 = sshll.u32 %s161, 4
      %s171 = int_to_ptr.hbm [resolvable:$true] %s170
      %s172 = sshll.u32 %s162, 4
      %s173 = int_to_ptr.vmem [resolvable:$true] %s172
      %175 = dma.hbm_to_vmem [thread:$0]  %s171, 16, %s173, [#allocation3]
      %s176 = sadd.s32 %s159, 1
      %s177 = sld [smem:[#allocation5 + %s176]]
      %s178 = scalar_lea.hbm %s1, %s177
      %s179 = scalar_lea.vmem [#allocation2], 9
      // Predicated region
      $region42: #{tpu_custom_call.1} parent=4 // pred_check
        _
      $region43: #{tpu_custom_call.1} parent=4 // pred_check_branch
        %181 = sbr.rel target = $region45
      $region44: #{tpu_custom_call.1} parent=4 // pred_region
        %182 = sst [smem:[#allocation10]] [#allocation29]
        %183 = sst [smem:[#allocation11]] [#allocation28]
      $region45: #{tpu_custom_call.1} parent=4 // pred_fallthru
        _
      %185 = shalt.err (0)
      %s187 = sshll.u32 %s178, 4
      %s188 = int_to_ptr.hbm [resolvable:$true] %s187
      %s189 = sshll.u32 %s179, 4
      %s190 = int_to_ptr.vmem [resolvable:$true] %s189
      %192 = dma.hbm_to_vmem [thread:$0]  %s188, 16, %s190, [#allocation3]
      %s193 = sadd.s32 %s159, 2
      %s194 = sld [smem:[#allocation5 + %s193]]
      %s195 = scalar_lea.hbm %s1, %s194
      %s196 = scalar_lea.vmem [#allocation2], 10
      // Predicated region
      $region46: #{tpu_custom_call.1} parent=4 // pred_check
        _
      $region47: #{tpu_custom_call.1} parent=4 // pred_check_branch
        %198 = sbr.rel target = $region49
      $region48: #{tpu_custom_call.1} parent=4 // pred_region
        %199 = sst [smem:[#allocation10]] [#allocation31]
        %200 = sst [smem:[#allocation11]] [#allocation30]
      $region49: #{tpu_custom_call.1} parent=4 // pred_fallthru
        _
      %202 = shalt.err (0)
      %s204 = sshll.u32 %s195, 4
      %s205 = int_to_ptr.hbm [resolvable:$true] %s204
      %s206 = sshll.u32 %s196, 4
      %s207 = int_to_ptr.vmem [resolvable:$true] %s206
      %209 = dma.hbm_to_vmem [thread:$0]  %s205, 16, %s207, [#allocation3]
      %s210 = sadd.s32 %s159, 3
      %s211 = sld [smem:[#allocation5 + %s210]]
      %s212 = scalar_lea.hbm %s1, %s211
      %s213 = scalar_lea.vmem [#allocation2], 11
      // Predicated region
      $region50: #{tpu_custom_call.1} parent=4 // pred_check
        _
      $region51: #{tpu_custom_call.1} parent=4 // pred_check_branch
        %215 = sbr.rel target = $region53
      $region52: #{tpu_custom_call.1} parent=4 // pred_region
        %216 = sst [smem:[#allocation10]] [#allocation33]
        %217 = sst [smem:[#allocation11]] [#allocation32]
      $region53: #{tpu_custom_call.1} parent=4 // pred_fallthru
        _
      %219 = shalt.err (0)
      %s221 = sshll.u32 %s212, 4
      %s222 = int_to_ptr.hbm [resolvable:$true] %s221
      %s223 = sshll.u32 %s213, 4
      %s224 = int_to_ptr.vmem [resolvable:$true] %s223
      %226 = dma.hbm_to_vmem [thread:$0]  %s222, 16, %s224, [#allocation3]
      %s227 = sadd.s32 %s159, 4
      %s228 = sld [smem:[#allocation5 + %s227]]
      %s229 = scalar_lea.hbm %s1, %s228
      %s230 = scalar_lea.vmem [#allocation2], 12
      // Predicated region
      $region54: #{tpu_custom_call.1} parent=4 // pred_check
        _
      $region55: #{tpu_custom_call.1} parent=4 // pred_check_branch
        %232 = sbr.rel target = $region57
      $region56: #{tpu_custom_call.1} parent=4 // pred_region
        %233 = sst [smem:[#allocation10]] [#allocation35]
        %234 = sst [smem:[#allocation11]] [#allocation34]
      $region57: #{tpu_custom_call.1} parent=4 // pred_fallthru
        _
      %236 = shalt.err (0)
      %s238 = sshll.u32 %s229, 4
      %s239 = int_to_ptr.hbm [resolvable:$true] %s238
      %s240 = sshll.u32 %s230, 4
      %s241 = int_to_ptr.vmem [resolvable:$true] %s240
      %243 = dma.hbm_to_vmem [thread:$0]  %s239, 16, %s241, [#allocation3]
      %s244 = sadd.s32 %s159, 5
      %s245 = sld [smem:[#allocation5 + %s244]]
      %s246 = scalar_lea.hbm %s1, %s245
      %s247 = scalar_lea.vmem [#allocation2], 13
      // Predicated region
      $region58: #{tpu_custom_call.1} parent=4 // pred_check
        _
      $region59: #{tpu_custom_call.1} parent=4 // pred_check_branch
        %249 = sbr.rel target = $region61
      $region60: #{tpu_custom_call.1} parent=4 // pred_region
        %250 = sst [smem:[#allocation10]] [#allocation37]
        %251 = sst [smem:[#allocation11]] [#allocation36]
      $region61: #{tpu_custom_call.1} parent=4 // pred_fallthru
        _
      %253 = shalt.err (0)
      %s255 = sshll.u32 %s246, 4
      %s256 = int_to_ptr.hbm [resolvable:$true] %s255
      %s257 = sshll.u32 %s247, 4
      %s258 = int_to_ptr.vmem [resolvable:$true] %s257
      %260 = dma.hbm_to_vmem [thread:$0]  %s256, 16, %s258, [#allocation3]
      %s261 = sadd.s32 %s159, 6
      %s262 = sld [smem:[#allocation5 + %s261]]
      %s263 = scalar_lea.hbm %s1, %s262
      %s264 = scalar_lea.vmem [#allocation2], 14
      // Predicated region
      $region62: #{tpu_custom_call.1} parent=4 // pred_check
        _
      $region63: #{tpu_custom_call.1} parent=4 // pred_check_branch
        %266 = sbr.rel target = $region65
      $region64: #{tpu_custom_call.1} parent=4 // pred_region
        %267 = sst [smem:[#allocation10]] [#allocation39]
        %268 = sst [smem:[#allocation11]] [#allocation38]
      $region65: #{tpu_custom_call.1} parent=4 // pred_fallthru
        _
      %270 = shalt.err (0)
      %s272 = sshll.u32 %s263, 4
      %s273 = int_to_ptr.hbm [resolvable:$true] %s272
      %s274 = sshll.u32 %s264, 4
      %s275 = int_to_ptr.vmem [resolvable:$true] %s274
      %277 = dma.hbm_to_vmem [thread:$0]  %s273, 16, %s275, [#allocation3]
      %s278 = sadd.s32 %s159, 7
      %s279 = sld [smem:[#allocation5 + %s278]]
      %s280 = scalar_lea.hbm %s1, %s279
      %s281 = scalar_lea.vmem [#allocation2], 15
      // Predicated region
      $region66: #{tpu_custom_call.1} parent=4 // pred_check
        _
      $region67: #{tpu_custom_call.1} parent=4 // pred_check_branch
        %283 = sbr.rel target = $region69
      $region68: #{tpu_custom_call.1} parent=4 // pred_region
        %284 = sst [smem:[#allocation10]] [#allocation41]
        %285 = sst [smem:[#allocation11]] [#allocation40]
      $region69: #{tpu_custom_call.1} parent=4 // pred_fallthru
        _
      %287 = shalt.err (0)
      %s289 = sshll.u32 %s280, 4
      %s290 = int_to_ptr.hbm [resolvable:$true] %s289
      %s291 = sshll.u32 %s281, 4
      %s292 = int_to_ptr.vmem [resolvable:$true] %s291
      %294 = dma.hbm_to_vmem [thread:$0]  %s290, 16, %s292, [#allocation3]
    $region5: #{tpu_custom_call.1} parent=1 // pred_fallthru
      _
    %s295 = sadd.s32 0, 1
    %p296 = scmp.lt.s32.totalorder %s295, 1
    // Predicated region
    $region70: #{tpu_custom_call.1} parent=1 // pred_check
      %p297 = pneg %p296
    $region71: #{tpu_custom_call.1} parent=1 // pred_check_branch
      %299 = sbr.rel (%p297) target = $region73
    $region72: #{tpu_custom_call.1} parent=1 // pred_region
      %s300 = sadd.s32 %s17, 1
      %p301 = scmp.lt.s32.totalorder %s295, 0
      %s302 = ssub.s32 0, %s295
      %s303 = scalar_select %p301, %s302, %s295
      %s304 = sand.u32 %s303, 1
      %s305 = ssub.s32 0, %s304
      %s306 = scalar_select %p301, %s305, %s304
      %p307 = scmp.ne.s32.totalorder %s306, 0
      %p308 = scmp.lt.s32.totalorder %s306, 0
      %p309 = pnand %p308, %p307
      %p310 = pneg %p309
      %s311 = sadd.s32 %s306, 2
      %s312 = scalar_select %p310, %s311, %s306
      %s313 = smul.u32 %s300, 2
      %s314 = smul.u32 %s313, 128
      %s315 = sld [smem:[#allocation5 + %s314]]
      %s316 = scalar_lea.hbm %s1, %s315
      %s317 = smul.u32 %s312, 16
      %s318 = scalar_lea.vmem [#allocation2], %s317
      %s319 = scalar_lea.sflag [#allocation3], %s312
      // Predicated region
      $region74: #{tpu_custom_call.1} parent=72 // pred_check
        _
      $region75: #{tpu_custom_call.1} parent=72 // pred_check_branch
        %321 = sbr.rel target = $region77
      $region76: #{tpu_custom_call.1} parent=72 // pred_region
        %322 = sst [smem:[#allocation10]] [#allocation43]
        %323 = sst [smem:[#allocation11]] [#allocation42]
      $region77: #{tpu_custom_call.1} parent=72 // pred_fallthru
        _
      %325 = shalt.err (0)
      %s327 = sshll.u32 %s316, 4
      %s328 = int_to_ptr.hbm [resolvable:$true] %s327
      %s329 = sshll.u32 %s318, 4
      %s330 = int_to_ptr.vmem [resolvable:$true] %s329
      %332 = dma.hbm_to_vmem [thread:$0]  %s328, 16, %s330, %s319
      %s333 = sadd.s32 %s314, 1
      %s334 = sld [smem:[#allocation5 + %s333]]
      %s335 = scalar_lea.hbm %s1, %s334
      %s336 = sadd.s32 1, %s317
      %s337 = scalar_lea.vmem [#allocation2], %s336
      // Predicated region
      $region78: #{tpu_custom_call.1} parent=72 // pred_check
        _
      $region79: #{tpu_custom_call.1} parent=72 // pred_check_branch
        %339 = sbr.rel target = $region81
      $region80: #{tpu_custom_call.1} parent=72 // pred_region
        %340 = sst [smem:[#allocation10]] [#allocation45]
        %341 = sst [smem:[#allocation11]] [#allocation44]
      $region81: #{tpu_custom_call.1} parent=72 // pred_fallthru
        _
      %343 = shalt.err (0)
      %s345 = sshll.u32 %s335, 4
      %s346 = int_to_ptr.hbm [resolvable:$true] %s345
      %s347 = sshll.u32 %s337, 4
      %s348 = int_to_ptr.vmem [resolvable:$true] %s347
      %350 = dma.hbm_to_vmem [thread:$0]  %s346, 16, %s348, %s319
      %s351 = sadd.s32 %s314, 2
      %s352 = sld [smem:[#allocation5 + %s351]]
      %s353 = scalar_lea.hbm %s1, %s352
      %s354 = sadd.s32 2, %s317
      %s355 = scalar_lea.vmem [#allocation2], %s354
      // Predicated region
      $region82: #{tpu_custom_call.1} parent=72 // pred_check
        _
      $region83: #{tpu_custom_call.1} parent=72 // pred_check_branch
        %357 = sbr.rel target = $region85
      $region84: #{tpu_custom_call.1} parent=72 // pred_region
        %358 = sst [smem:[#allocation10]] [#allocation47]
        %359 = sst [smem:[#allocation11]] [#allocation46]
      $region85: #{tpu_custom_call.1} parent=72 // pred_fallthru
        _
      %361 = shalt.err (0)
      %s363 = sshll.u32 %s353, 4
      %s364 = int_to_ptr.hbm [resolvable:$true] %s363
      %s365 = sshll.u32 %s355, 4
      %s366 = int_to_ptr.vmem [resolvable:$true] %s365
      %368 = dma.hbm_to_vmem [thread:$0]  %s364, 16, %s366, %s319
      %s369 = sadd.s32 %s314, 3
      %s370 = sld [smem:[#allocation5 + %s369]]
      %s371 = scalar_lea.hbm %s1, %s370
      %s372 = sadd.s32 3, %s317
      %s373 = scalar_lea.vmem [#allocation2], %s372
      // Predicated region
      $region86: #{tpu_custom_call.1} parent=72 // pred_check
        _
      $region87: #{tpu_custom_call.1} parent=72 // pred_check_branch
        %375 = sbr.rel target = $region89
      $region88: #{tpu_custom_call.1} parent=72 // pred_region
        %376 = sst [smem:[#allocation10]] [#allocation49]
        %377 = sst [smem:[#allocation11]] [#allocation48]
      $region89: #{tpu_custom_call.1} parent=72 // pred_fallthru
        _
      %379 = shalt.err (0)
      %s381 = sshll.u32 %s371, 4
      %s382 = int_to_ptr.hbm [resolvable:$true] %s381
      %s383 = sshll.u32 %s373, 4
      %s384 = int_to_ptr.vmem [resolvable:$true] %s383
      %386 = dma.hbm_to_vmem [thread:$0]  %s382, 16, %s384, %s319
      %s387 = sadd.s32 %s314, 4
      %s388 = sld [smem:[#allocation5 + %s387]]
      %s389 = scalar_lea.hbm %s1, %s388
      %s390 = sadd.s32 4, %s317
      %s391 = scalar_lea.vmem [#allocation2], %s390
      // Predicated region
      $region90: #{tpu_custom_call.1} parent=72 // pred_check
        _
      $region91: #{tpu_custom_call.1} parent=72 // pred_check_branch
        %393 = sbr.rel target = $region93
      $region92: #{tpu_custom_call.1} parent=72 // pred_region
        %394 = sst [smem:[#allocation10]] [#allocation51]
        %395 = sst [smem:[#allocation11]] [#allocation50]
      $region93: #{tpu_custom_call.1} parent=72 // pred_fallthru
        _
      %397 = shalt.err (0)
      %s399 = sshll.u32 %s389, 4
      %s400 = int_to_ptr.hbm [resolvable:$true] %s399
      %s401 = sshll.u32 %s391, 4
      %s402 = int_to_ptr.vmem [resolvable:$true] %s401
      %404 = dma.hbm_to_vmem [thread:$0]  %s400, 16, %s402, %s319
      %s405 = sadd.s32 %s314, 5
      %s406 = sld [smem:[#allocation5 + %s405]]
      %s407 = scalar_lea.hbm %s1, %s406
      %s408 = sadd.s32 5, %s317
      %s409 = scalar_lea.vmem [#allocation2], %s408
      // Predicated region
      $region94: #{tpu_custom_call.1} parent=72 // pred_check
        _
      $region95: #{tpu_custom_call.1} parent=72 // pred_check_branch
        %411 = sbr.rel target = $region97
      $region96: #{tpu_custom_call.1} parent=72 // pred_region
        %412 = sst [smem:[#allocation10]] [#allocation53]
        %413 = sst [smem:[#allocation11]] [#allocation52]
      $region97: #{tpu_custom_call.1} parent=72 // pred_fallthru
        _
      %415 = shalt.err (0)
      %s417 = sshll.u32 %s407, 4
      %s418 = int_to_ptr.hbm [resolvable:$true] %s417
      %s419 = sshll.u32 %s409, 4
      %s420 = int_to_ptr.vmem [resolvable:$true] %s419
      %422 = dma.hbm_to_vmem [thread:$0]  %s418, 16, %s420, %s319
      %s423 = sadd.s32 %s314, 6
      %s424 = sld [smem:[#allocation5 + %s423]]
      %s425 = scalar_lea.hbm %s1, %s424
      %s426 = sadd.s32 6, %s317
      %s427 = scalar_lea.vmem [#allocation2], %s426
      // Predicated region
      $region98: #{tpu_custom_call.1} parent=72 // pred_check
        _
      $region99: #{tpu_custom_call.1} parent=72 // pred_check_branch
        %429 = sbr.rel target = $region101
      $region100: #{tpu_custom_call.1} parent=72 // pred_region
        %430 = sst [smem:[#allocation10]] [#allocation55]
        %431 = sst [smem:[#allocation11]] [#allocation54]
      $region101: #{tpu_custom_call.1} parent=72 // pred_fallthru
        _
      %433 = shalt.err (0)
      %s435 = sshll.u32 %s425, 4
      %s436 = int_to_ptr.hbm [resolvable:$true] %s435
      %s437 = sshll.u32 %s427, 4
      %s438 = int_to_ptr.vmem [resolvable:$true] %s437
      %440 = dma.hbm_to_vmem [thread:$0]  %s436, 16, %s438, %s319
      %s441 = sadd.s32 %s314, 7
      %s442 = sld [smem:[#allocation5 + %s441]]
      %s443 = scalar_lea.hbm %s1, %s442
      %s444 = sadd.s32 7, %s317
      %s445 = scalar_lea.vmem [#allocation2], %s444
      // Predicated region
      $region102: #{tpu_custom_call.1} parent=72 // pred_check
        _
      $region103: #{tpu_custom_call.1} parent=72 // pred_check_branch
        %447 = sbr.rel target = $region105
      $region104: #{tpu_custom_call.1} parent=72 // pred_region
        %448 = sst [smem:[#allocation10]] [#allocation57]
        %449 = sst [smem:[#allocation11]] [#allocation56]
      $region105: #{tpu_custom_call.1} parent=72 // pred_fallthru
        _
      %451 = shalt.err (0)
      %s453 = sshll.u32 %s443, 4
      %s454 = int_to_ptr.hbm [resolvable:$true] %s453
      %s455 = sshll.u32 %s445, 4
      %s456 = int_to_ptr.vmem [resolvable:$true] %s455
      %458 = dma.hbm_to_vmem [thread:$0]  %s454, 16, %s456, %s319
      %s459 = sadd.s32 %s313, 1
      %s460 = smul.u32 %s459, 128
      %s461 = sld [smem:[#allocation5 + %s460]]
      %s462 = scalar_lea.hbm %s1, %s461
      %s463 = sadd.s32 8, %s317
      %s464 = scalar_lea.vmem [#allocation2], %s463
      // Predicated region
      $region106: #{tpu_custom_call.1} parent=72 // pred_check
        _
      $region107: #{tpu_custom_call.1} parent=72 // pred_check_branch
        %466 = sbr.rel target = $region109
      $region108: #{tpu_custom_call.1} parent=72 // pred_region
        %467 = sst [smem:[#allocation10]] [#allocation59]
        %468 = sst [smem:[#allocation11]] [#allocation58]
      $region109: #{tpu_custom_call.1} parent=72 // pred_fallthru
        _
      %470 = shalt.err (0)
      %s472 = sshll.u32 %s462, 4
      %s473 = int_to_ptr.hbm [resolvable:$true] %s472
      %s474 = sshll.u32 %s464, 4
      %s475 = int_to_ptr.vmem [resolvable:$true] %s474
      %477 = dma.hbm_to_vmem [thread:$0]  %s473, 16, %s475, %s319
      %s478 = sadd.s32 %s460, 1
      %s479 = sld [smem:[#allocation5 + %s478]]
      %s480 = scalar_lea.hbm %s1, %s479
      %s481 = sadd.s32 9, %s317
      %s482 = scalar_lea.vmem [#allocation2], %s481
      // Predicated region
      $region110: #{tpu_custom_call.1} parent=72 // pred_check
        _
      $region111: #{tpu_custom_call.1} parent=72 // pred_check_branch
        %484 = sbr.rel target = $region113
      $region112: #{tpu_custom_call.1} parent=72 // pred_region
        %485 = sst [smem:[#allocation10]] [#allocation61]
        %486 = sst [smem:[#allocation11]] [#allocation60]
      $region113: #{tpu_custom_call.1} parent=72 // pred_fallthru
        _
      %488 = shalt.err (0)
      %s490 = sshll.u32 %s480, 4
      %s491 = int_to_ptr.hbm [resolvable:$true] %s490
      %s492 = sshll.u32 %s482, 4
      %s493 = int_to_ptr.vmem [resolvable:$true] %s492
      %495 = dma.hbm_to_vmem [thread:$0]  %s491, 16, %s493, %s319
      %s496 = sadd.s32 %s460, 2
      %s497 = sld [smem:[#allocation5 + %s496]]
      %s498 = scalar_lea.hbm %s1, %s497
      %s499 = sadd.s32 10, %s317
      %s500 = scalar_lea.vmem [#allocation2], %s499
      // Predicated region
      $region114: #{tpu_custom_call.1} parent=72 // pred_check
        _
      $region115: #{tpu_custom_call.1} parent=72 // pred_check_branch
        %502 = sbr.rel target = $region117
      $region116: #{tpu_custom_call.1} parent=72 // pred_region
        %503 = sst [smem:[#allocation10]] [#allocation63]
        %504 = sst [smem:[#allocation11]] [#allocation62]
      $region117: #{tpu_custom_call.1} parent=72 // pred_fallthru
        _
      %506 = shalt.err (0)
      %s508 = sshll.u32 %s498, 4
      %s509 = int_to_ptr.hbm [resolvable:$true] %s508
      %s510 = sshll.u32 %s500, 4
      %s511 = int_to_ptr.vmem [resolvable:$true] %s510
      %513 = dma.hbm_to_vmem [thread:$0]  %s509, 16, %s511, %s319
      %s514 = sadd.s32 %s460, 3
      %s515 = sld [smem:[#allocation5 + %s514]]
      %s516 = scalar_lea.hbm %s1, %s515
      %s517 = sadd.s32 11, %s317
      %s518 = scalar_lea.vmem [#allocation2], %s517
      // Predicated region
      $region118: #{tpu_custom_call.1} parent=72 // pred_check
        _
      $region119: #{tpu_custom_call.1} parent=72 // pred_check_branch
        %520 = sbr.rel target = $region121
      $region120: #{tpu_custom_call.1} parent=72 // pred_region
        %521 = sst [smem:[#allocation10]] [#allocation65]
        %522 = sst [smem:[#allocation11]] [#allocation64]
      $region121: #{tpu_custom_call.1} parent=72 // pred_fallthru
        _
      %524 = shalt.err (0)
      %s526 = sshll.u32 %s516, 4
      %s527 = int_to_ptr.hbm [resolvable:$true] %s526
      %s528 = sshll.u32 %s518, 4
      %s529 = int_to_ptr.vmem [resolvable:$true] %s528
      %531 = dma.hbm_to_vmem [thread:$0]  %s527, 16, %s529, %s319
      %s532 = sadd.s32 %s460, 4
      %s533 = sld [smem:[#allocation5 + %s532]]
      %s534 = scalar_lea.hbm %s1, %s533
      %s535 = sadd.s32 12, %s317
      %s536 = scalar_lea.vmem [#allocation2], %s535
      // Predicated region
      $region122: #{tpu_custom_call.1} parent=72 // pred_check
        _
      $region123: #{tpu_custom_call.1} parent=72 // pred_check_branch
        %538 = sbr.rel target = $region125
      $region124: #{tpu_custom_call.1} parent=72 // pred_region
        %539 = sst [smem:[#allocation10]] [#allocation67]
        %540 = sst [smem:[#allocation11]] [#allocation66]
      $region125: #{tpu_custom_call.1} parent=72 // pred_fallthru
        _
      %542 = shalt.err (0)
      %s544 = sshll.u32 %s534, 4
      %s545 = int_to_ptr.hbm [resolvable:$true] %s544
      %s546 = sshll.u32 %s536, 4
      %s547 = int_to_ptr.vmem [resolvable:$true] %s546
      %549 = dma.hbm_to_vmem [thread:$0]  %s545, 16, %s547, %s319
      %s550 = sadd.s32 %s460, 5
      %s551 = sld [smem:[#allocation5 + %s550]]
      %s552 = scalar_lea.hbm %s1, %s551
      %s553 = sadd.s32 13, %s317
      %s554 = scalar_lea.vmem [#allocation2], %s553
      // Predicated region
      $region126: #{tpu_custom_call.1} parent=72 // pred_check
        _
      $region127: #{tpu_custom_call.1} parent=72 // pred_check_branch
        %556 = sbr.rel target = $region129
      $region128: #{tpu_custom_call.1} parent=72 // pred_region
        %557 = sst [smem:[#allocation10]] [#allocation69]
        %558 = sst [smem:[#allocation11]] [#allocation68]
      $region129: #{tpu_custom_call.1} parent=72 // pred_fallthru
        _
      %560 = shalt.err (0)
      %s562 = sshll.u32 %s552, 4
      %s563 = int_to_ptr.hbm [resolvable:$true] %s562
      %s564 = sshll.u32 %s554, 4
      %s565 = int_to_ptr.vmem [resolvable:$true] %s564
      %567 = dma.hbm_to_vmem [thread:$0]  %s563, 16, %s565, %s319
      %s568 = sadd.s32 %s460, 6
      %s569 = sld [smem:[#allocation5 + %s568]]
      %s570 = scalar_lea.hbm %s1, %s569
      %s571 = sadd.s32 14, %s317
      %s572 = scalar_lea.vmem [#allocation2], %s571
      // Predicated region
      $region130: #{tpu_custom_call.1} parent=72 // pred_check
        _
      $region131: #{tpu_custom_call.1} parent=72 // pred_check_branch
        %574 = sbr.rel target = $region133
      $region132: #{tpu_custom_call.1} parent=72 // pred_region
        %575 = sst [smem:[#allocation10]] [#allocation71]
        %576 = sst [smem:[#allocation11]] [#allocation70]
      $region133: #{tpu_custom_call.1} parent=72 // pred_fallthru
        _
      %578 = shalt.err (0)
      %s580 = sshll.u32 %s570, 4
      %s581 = int_to_ptr.hbm [resolvable:$true] %s580
      %s582 = sshll.u32 %s572, 4
      %s583 = int_to_ptr.vmem [resolvable:$true] %s582
      %585 = dma.hbm_to_vmem [thread:$0]  %s581, 16, %s583, %s319
      %s586 = sadd.s32 %s460, 7
      %s587 = sld [smem:[#allocation5 + %s586]]
      %s588 = scalar_lea.hbm %s1, %s587
      %s589 = sadd.s32 15, %s317
      %s590 = scalar_lea.vmem [#allocation2], %s589
      // Predicated region
      $region134: #{tpu_custom_call.1} parent=72 // pred_check
        _
      $region135: #{tpu_custom_call.1} parent=72 // pred_check_branch
        %592 = sbr.rel target = $region137
      $region136: #{tpu_custom_call.1} parent=72 // pred_region
        %593 = sst [smem:[#allocation10]] [#allocation73]
        %594 = sst [smem:[#allocation11]] [#allocation72]
      $region137: #{tpu_custom_call.1} parent=72 // pred_fallthru
        _
      %596 = shalt.err (0)
      %s598 = sshll.u32 %s588, 4
      %s599 = int_to_ptr.hbm [resolvable:$true] %s598
      %s600 = sshll.u32 %s590, 4
      %s601 = int_to_ptr.vmem [resolvable:$true] %s600
      %603 = dma.hbm_to_vmem [thread:$0]  %s599, 16, %s601, %s319
    $region73: #{tpu_custom_call.1} parent=1 // pred_fallthru
      _
    %s604 = ssub.s32 0, 0
    %s605 = ssub.s32 0, 0
    %p606 = scmp.ne.s32.totalorder 0, 0
    %p607 = scmp.lt.s32.totalorder 0, 0
    %p608 = pnand %p607, %p606
    %p609 = pneg %p608
    %s610 = sadd.s32 0, 2
    %s611 = scalar_select %p609, %s610, 0
    %s612 = scalar_lea.sflag [#allocation3], %s611
    %s613 = smul.u32 1, 1
    %s614 = sshll.u32 %s613, 4
    %615 = dma.done %s612, %s614
    %s616 = sshll.u32 %s613, 4
    %617 = dma.done %s612, %s616
    %s618 = sshll.u32 %s613, 4
    %619 = dma.done %s612, %s618
    %s620 = sshll.u32 %s613, 4
    %621 = dma.done %s612, %s620
    %s622 = sshll.u32 %s613, 4
    %623 = dma.done %s612, %s622
    %s624 = sshll.u32 %s613, 4
    %625 = dma.done %s612, %s624
    %s626 = sshll.u32 %s613, 4
    %627 = dma.done %s612, %s626
    %s628 = sshll.u32 %s613, 4
    %629 = dma.done %s612, %s628
    %s630 = sshll.u32 %s613, 4
    %631 = dma.done %s612, %s630
    %s632 = sshll.u32 %s613, 4
    %633 = dma.done %s612, %s632
    %s634 = sshll.u32 %s613, 4
    %635 = dma.done %s612, %s634
    %s636 = sshll.u32 %s613, 4
    %637 = dma.done %s612, %s636
    %s638 = sshll.u32 %s613, 4
    %639 = dma.done %s612, %s638
    %s640 = sshll.u32 %s613, 4
    %641 = dma.done %s612, %s640
    %s642 = sshll.u32 %s613, 4
    %643 = dma.done %s612, %s642
    %s644 = sshll.u32 %s613, 4
    %645 = dma.done %s612, %s644
    %s646 = smul.u32 %s611, 16
    %s647 = scalar_lea.vmem [#allocation2], %s646
    %v648 = vld [vmem:[%s647] sm:$0xff]
    %v649 = vld [vmem:[%s647 + $0x8] sm:$0xff]
    %v650 = vrot.slane %v648, 4
    %v651 = vmax.f32 %v648, %v650
    %v652 = vrot.slane %v651, 2
    %v653 = vmax.f32 %v651, %v652
    %v654 = vrot.slane %v653, 1
    %v655 = vmax.f32 %v653, %v654
    %v656 = vrot.slane %v649, 4
    %v657 = vmax.f32 %v649, %v656
    %v658 = vrot.slane %v657, 2
    %v659 = vmax.f32 %v657, %v658
    %v660 = vrot.slane %v659, 1
    %v661 = vmax.f32 %v659, %v660
    %vm664 = vcmask 1041409
    %v665 = vsel %vm664, %v661, %v655
    %667 = vst [vmem:[#allocation6] sm:$0x3] %v665
    // Predicated region
    $region138: #{tpu_custom_call.1} parent=1 // pred_check
      _
    $region139: #{tpu_custom_call.1} parent=1 // pred_check_branch
      %669 = sbr.rel (0) target = $region141
    $region140: #{tpu_custom_call.1} parent=1 // pred_region
      %s670 = sadd.s32 0, 0
      %672 = vsyncadd [#allocation7], 0
      %s673 = smul.addr %s670, 2
      %s674 = scalar_lea.hbm %s2, %s673
      %s676 = sshll.u32 [#allocation6], 4
      %s677 = int_to_ptr.vmem [resolvable:$true] %s676
      %s678 = sshll.u32 %s674, 4
      %s679 = int_to_ptr.hbm [resolvable:$true] %s678
      %681 = dma.vmem_to_hbm [thread:$0]  %s677, 32, %s679, [#allocation7]
    $region141: #{tpu_custom_call.1} parent=1 // pred_fallthru
      _
    // Predicated region
    $region142: #{tpu_custom_call.1} parent=1 // pred_check
      _
    $region143: #{tpu_custom_call.1} parent=1 // pred_check_branch
      %683 = sbr.rel (0) target = $region145
    $region144: #{tpu_custom_call.1} parent=1 // pred_region
      %685 = dma.done [#allocation7], 32
    $region145: #{tpu_custom_call.1} parent=1 // pred_fallthru
      _
    %686 = vsyncpa [#allocation7], 1
  %687 = vsyncmov [#allocation3]
  %s688 = vpop.sfrf %687
  %p689 = scmp.eq.s32.totalorder %s688, 0
  %p690 = pneg %p689
  %692 = shalt.err (%p690)
  %s693 = scalar_lea.sflag [#allocation3], 1
  %694 = vsyncmov %s693
  %s695 = vpop.sfrf %694
  %p696 = scmp.eq.s32.totalorder %s695, 0
  %p697 = pneg %p696
  %699 = shalt.err (%p697)

</llo_original>
